<compile_context>
chip_gen: v7x
topology: tpu7x:2x2x1
jax: 0.10.0
libtpu: 0.0.40
codegen_flags: <defaults>
</compile_context>

<pallas_src>
import jax
import jax.numpy as jnp
from jax.experimental import pallas as pl
from jax.experimental.pallas import tpu as pltpu


def _round_up(x, m):
    return (x + m - 1) // m * m


def _pad2(w, rows, cols):
    return jnp.pad(w, ((0, rows - w.shape[0]), (0, cols - w.shape[1])))


def _pad1(v, n):
    return jnp.pad(v, (0, n - v.shape[0]))


# ---------------------------------------------------------------------------
# Pallas kernel: multi-layer tanh-RNN recurrence only (time-major, chunked).
# ---------------------------------------------------------------------------
def _make_rnn_kernel(nlayers: int, t_chunk: int):
    has_rest = nlayers > 1

    def kernel(*refs):
        if has_rest:
            xh_ref, w_hh0_ref, w_cat_ref, b_ref, out_ref, h_scr = refs
        else:
            xh_ref, w_hh0_ref, out_ref, h_scr = refs
            w_cat_ref = b_ref = None

        @pl.when(pl.program_id(0) == 0)
        def _init():
            # hidden = None in the PyTorch forward -> zero initial state.
            h_scr[...] = jnp.zeros_like(h_scr)

        def step(i, carry):
            # ----- layer 0: x_t @ W_ih0 + b0 was precomputed (xh_ref holds the
            # pre-activation); add the recurrent term, tanh in f32.
            h_prev0 = h_scr[0]
            h0 = jnp.tanh(
                xh_ref[i]
                + jnp.dot(h_prev0.astype(jnp.bfloat16), w_hh0_ref[...],
                          preferred_element_type=jnp.float32))
            h_scr[0] = h0

            inp = h0
            # ----- layers 1..L-1: one fused MXU dot per layer:
            #   tanh(concat([x_t, h_{t-1}]) @ [W_ih; W_hh] + (b_ih + b_hh))
            for layer in range(1, nlayers):
                h_prev = h_scr[layer]
                cat = jnp.concatenate([inp, h_prev], axis=-1).astype(jnp.bfloat16)
                h_new = jnp.tanh(
                    jnp.dot(cat, w_cat_ref[layer - 1],
                            preferred_element_type=jnp.float32)
                    + b_ref[layer - 1])
                h_scr[layer] = h_new
                inp = h_new

            out_ref[i] = inp          # top-layer hidden state for this timestep
            return carry

        jax.lax.fori_loop(0, t_chunk, step, 0, unroll=True)

    return kernel


# ---------------------------------------------------------------------------
# Wrapper: parallel pre/post matmuls in XLA, sequential recurrence in Pallas.
# ---------------------------------------------------------------------------
def char_lm_forward(seq_batch, params, *, t_chunk=16):
    """Forward matching CharLanguageModel.forward.  seq_batch: (B,T) int32 -> (B,T,V) f32."""
    emb_w = params["embedding"]            # (V, E)
    w_ih_list = params["w_ih"]             # [(E,H), (H,H), ...]   (in, out) layout
    w_hh_list = params["w_hh"]             # [(H,H)] * nlayers
    b_list = params["b"]                   # [(H,)] * nlayers      (b_ih + b_hh)
    w_sc = params["w_sc"].astype(jnp.float32)   # (H, V)
    b_sc = params["b_sc"].astype(jnp.float32)   # (V,)

    nlayers = len(w_hh_list)
    B, T = seq_batch.shape
    H = w_hh_list[0].shape[0]

    Bp = _round_up(B, 8)          # sublane-dense batch
    Hp = _round_up(H, 128)        # lane-dense hidden
    Tc = max(1, min(t_chunk, T))  # timesteps per grid step
    grid_t = pl.cdiv(T, Tc)
    Tp = grid_t * Tc

    # --- parallel pre-work (plain XLA): embedding + layer-0 input projection ---
    x_tm = emb_w[seq_batch.T].astype(jnp.float32)                     # (T, B, E)
    pre0 = (jnp.einsum("tbe,eh->tbh", x_tm, w_ih_list[0].astype(jnp.float32))
            + b_list[0].astype(jnp.float32))                          # (T, B, H)
    xh = jnp.pad(pre0, ((0, Tp - T), (0, Bp - B), (0, Hp - H)))       # (Tp, Bp, Hp)

    # --- pack recurrence weights (bf16, padded, single-buffered in VMEM) ---
    w_hh0 = _pad2(w_hh_list[0].astype(jnp.float32), Hp, Hp).astype(jnp.bfloat16)

    operands = [xh, w_hh0]
    in_specs = [
        pl.BlockSpec((Tc, Bp, Hp), lambda c: (c, 0, 0)),
        pl.BlockSpec(memory_space=pltpu.MemorySpace.VMEM),            # grid-invariant
    ]
    if nlayers > 1:
        w_cat = jnp.stack([
            jnp.concatenate(
                [_pad2(w_ih_list[l].astype(jnp.float32), Hp, Hp),
                 _pad2(w_hh_list[l].astype(jnp.float32), Hp, Hp)], axis=0)
            for l in range(1, nlayers)]).astype(jnp.bfloat16)          # (L-1, 2Hp, Hp)
        b_rest = jnp.stack([_pad1(b_list[l].astype(jnp.float32), Hp)
                            for l in range(1, nlayers)]
                           ).reshape(nlayers - 1, 1, Hp)               # (L-1, 1, Hp) f32
        operands += [w_cat, b_rest]
        in_specs += [pl.BlockSpec(memory_space=pltpu.MemorySpace.VMEM)] * 2

    hs = pl.pallas_call(
        _make_rnn_kernel(nlayers, Tc),
        out_shape=jax.ShapeDtypeStruct((Tp, Bp, Hp), jnp.float32),
        grid=(grid_t,),
        in_specs=in_specs,
        out_specs=pl.BlockSpec((Tc, Bp, Hp), lambda c: (c, 0, 0)),
        scratch_shapes=[pltpu.VMEM((nlayers, Bp, Hp), jnp.float32)],
        compiler_params=pltpu.CompilerParams(
            dimension_semantics=("arbitrary",),       # recurrence is sequential
            vmem_limit_bytes=32 * 1024 * 1024),
    )(*operands)

    # --- parallel scoring (plain XLA): (T*B, H) @ (H, V) + b_sc, back to batch-first ---
    h_top = hs[:T, :B, :H]                                             # (T, B, H)
    logits = jnp.einsum("tbh,hv->btv", h_top, w_sc) + b_sc             # (B, T, V)
    return logits


# ---------------------------------------------------------------------------
# Pure-JAX reference (for a correctness check)
# ---------------------------------------------------------------------------
def reference_forward(seq_batch, params):
    emb_w = params["embedding"]
    x = emb_w[seq_batch].astype(jnp.float32)        # (B, T, E)
    B, T, _ = x.shape
    nlayers = len(params["w_hh"])
    for layer in range(nlayers):
        w_ih = params["w_ih"][layer]
        w_hh = params["w_hh"][layer]
        b = params["b"][layer]
        H = w_hh.shape[0]
        h = jnp.zeros((B, H), jnp.float32)
        outs = []
        for t in range(T):
            h = jnp.tanh(x[:, t] @ w_ih + h @ w_hh + b)
            outs.append(h)
        x = jnp.stack(outs, axis=1)                 # (B, T, H)
    flat = x.reshape(-1, x.shape[-1]) @ params["w_sc"] + params["b_sc"]
    return flat.reshape(B, T, -1)


# ---------------------------------------------------------------------------
# Deterministic parameter init (matches the nn.Module's shapes)
# ---------------------------------------------------------------------------
def init_params(key, vocab_size, embed_size, hidden_size, nlayers):
    keys = jax.random.split(key, 4 + 4 * nlayers)
    k = 1.0 / jnp.sqrt(hidden_size)
    params = {}
    # nn.Embedding(vocab_size, embed_size): N(0, 1)
    params["embedding"] = jax.random.normal(
        keys[0], (vocab_size, embed_size), jnp.float32)
    w_ih, w_hh, b = [], [], []
    for layer in range(nlayers):
        in_dim = embed_size if layer == 0 else hidden_size
        kw = keys[4 + 4 * layer: 8 + 4 * layer]
        # stored transposed relative to PyTorch: (in_dim, hidden)
        w_ih.append(jax.random.uniform(kw[0], (in_dim, hidden_size),
                                       jnp.float32, -k, k))
        w_hh.append(jax.random.uniform(kw[1], (hidden_size, hidden_size),
                                       jnp.float32, -k, k))
        b_ih = jax.random.uniform(kw[2], (hidden_size,), jnp.float32, -k, k)
        b_hh = jax.random.uniform(kw[3], (hidden_size,), jnp.float32, -k, k)
        b.append(b_ih + b_hh)   # the two RNN biases always appear summed
    params["w_ih"], params["w_hh"], params["b"] = w_ih, w_hh, b
    # nn.Linear(hidden_size, vocab_size), stored transposed: (hidden, vocab)
    params["w_sc"] = jax.random.uniform(
        keys[1], (hidden_size, vocab_size), jnp.float32, -k, k)
    params["b_sc"] = jax.random.uniform(
        keys[2], (vocab_size,), jnp.float32, -k, k)
    return params


# TODO(synk): sample_word() (host-side autoregressive Categorical sampling loop)
# has no clean single-kernel Pallas equivalent and is not implemented here.

if __name__ == "__main__":
    vocab_size, embed_size, hidden_size, nlayers = 16, 8, 32, 2
    batch, seq_len = 2, 8

    key = jax.random.PRNGKey(0)
    k_param, k_data = jax.random.split(key)
    params = init_params(k_param, vocab_size, embed_size, hidden_size, nlayers)
    seq_batch = jax.random.randint(k_data, (batch, seq_len), 0, vocab_size,
                                   dtype=jnp.int32)

    out = char_lm_forward(seq_batch, params)
    out = jax.block_until_ready(out)
    assert out.shape == (batch, seq_len, vocab_size), out.shape

    ref = jax.block_until_ready(reference_forward(seq_batch, params))
    # bf16 recurrence weights vs f32 reference -> slightly looser tolerance.
    assert jnp.allclose(out, ref, atol=2e-2, rtol=2e-2), \
        float(jnp.max(jnp.abs(out - ref)))

    print("KERNEL_OK")
</pallas_src>

<mosaic_0001>
module attributes {stable_mosaic.version = 11 : i64} {
  func.func @kernel(%arg0: i32, %arg1: memref<8x8x128xf32, #tpu.memory_space<vmem>>, %arg2: memref<128x128xbf16, #tpu.memory_space<vmem>>, %arg3: memref<1x256x128xbf16, #tpu.memory_space<vmem>>, %arg4: memref<1x1x128xf32, #tpu.memory_space<vmem>>, %arg5: memref<8x8x128xf32, #tpu.memory_space<vmem>>, %arg6: memref<2x8x128xf32, #tpu.memory_space<vmem>>) attributes {dimension_semantics = [#tpu.dimension_semantics<arbitrary>], iteration_bounds = array<i64: 1>, scalar_prefetch = 0 : i64, scratch_operands = 1 : i64, tpu.core_type = #tpu.core_type<tc>, window_params = [{transform_indices = @transform_0, window_bounds = array<i64: 8, 8, 128>}, {pipeline_mode = #tpu.pipeline_mode<synchronous>, transform_indices = @transform_1, window_bounds = array<i64: 128, 128>}, {pipeline_mode = #tpu.pipeline_mode<synchronous>, transform_indices = @transform_2, window_bounds = array<i64: 1, 256, 128>}, {pipeline_mode = #tpu.pipeline_mode<synchronous>, transform_indices = @transform_3, window_bounds = array<i64: 1, 1, 128>}, {transform_indices = @transform_4, window_bounds = array<i64: 8, 8, 128>}]} {
    %c0_i32 = arith.constant 0 : i32
    %0 = arith.cmpi eq, %arg0, %c0_i32 : i32
    %1 = arith.extui %0 : i1 to i32
    %c0_i32_0 = arith.constant 0 : i32
    %2 = arith.cmpi ne, %1, %c0_i32_0 : i32
    scf.if %2 {
      %cst_207 = arith.constant 0.000000e+00 : f32
      %259 = vector.broadcast %cst_207 : f32 to vector<2x8x128xf32>
      %c0_208 = arith.constant 0 : index
      %c0_209 = arith.constant 0 : index
      %c0_210 = arith.constant 0 : index
      %260 = vector.load %arg6[%c0_208, %c0_209, %c0_210] : memref<2x8x128xf32, #tpu.memory_space<vmem>>, vector<2x8x128xf32>
      tpu.vector_store %arg6[%c0_208, %c0_209, %c0_210], %259 {strides = array<i32>} : memref<2x8x128xf32, #tpu.memory_space<vmem>>, vector<2x8x128xf32>,
    } else {
    }
    %c0_i32_1 = arith.constant 0 : i32
    %c0 = arith.constant 0 : index
    %c0_2 = arith.constant 0 : index
    %c0_3 = arith.constant 0 : index
    %3 = vector.load %arg6[%c0, %c0_2, %c0_3] : memref<2x8x128xf32, #tpu.memory_space<vmem>>, vector<1x8x128xf32>
    %4 = vector.shape_cast %3 : vector<1x8x128xf32> to vector<8x128xf32>
    %5 = arith.index_cast %c0_i32_1 : i32 to index
    %c0_4 = arith.constant 0 : index
    %c0_5 = arith.constant 0 : index
    %6 = vector.load %arg1[%5, %c0_4, %c0_5] : memref<8x8x128xf32, #tpu.memory_space<vmem>>, vector<1x8x128xf32>
    %7 = vector.shape_cast %6 : vector<1x8x128xf32> to vector<8x128xf32>
    %8 = arith.truncf %4 : vector<8x128xf32> to vector<8x128xbf16>
    %c0_6 = arith.constant 0 : index
    %c0_7 = arith.constant 0 : index
    %9 = vector.load %arg2[%c0_6, %c0_7] : memref<128x128xbf16, #tpu.memory_space<vmem>>, vector<128x128xbf16>
    %cst = arith.constant dense<0.000000e+00> : vector<8x128xf32>
    %10 = tpu.matmul %8, %9, %cst {dimension_numbers = #tpu.dot_dimension_numbers<[1], [0], [0], [1], [0, 0, 1, 1], [], []>} : vector<8x128xbf16>, vector<128x128xbf16>, vector<8x128xf32> -> vector<8x128xf32>
    %11 = arith.addf %7, %10 : vector<8x128xf32>
    %12 = math.tanh %11 : vector<8x128xf32>
    %c0_8 = arith.constant 0 : index
    %c0_9 = arith.constant 0 : index
    %c0_10 = arith.constant 0 : index
    %13 = vector.load %arg6[%c0_8, %c0_9, %c0_10] : memref<2x8x128xf32, #tpu.memory_space<vmem>>, vector<1x8x128xf32>
    %14 = vector.shape_cast %13 : vector<1x8x128xf32> to vector<8x128xf32>
    %15 = vector.shape_cast %12 : vector<8x128xf32> to vector<1x8x128xf32>
    tpu.vector_store %arg6[%c0_8, %c0_9, %c0_10], %15 {strides = array<i32>} : memref<2x8x128xf32, #tpu.memory_space<vmem>>, vector<1x8x128xf32>,
    %c1 = arith.constant 1 : index
    %c0_11 = arith.constant 0 : index
    %c0_12 = arith.constant 0 : index
    %16 = vector.load %arg6[%c1, %c0_11, %c0_12] : memref<2x8x128xf32, #tpu.memory_space<vmem>>, vector<1x8x128xf32>
    %17 = vector.shape_cast %16 : vector<1x8x128xf32> to vector<8x128xf32>
    %18 = tpu.concatenate %12, %17 in 1 : vector<8x128xf32>, vector<8x128xf32> -> vector<8x256xf32>
    %19 = arith.truncf %18 : vector<8x256xf32> to vector<8x256xbf16>
    %c0_13 = arith.constant 0 : index
    %c0_14 = arith.constant 0 : index
    %c0_15 = arith.constant 0 : index
    %20 = vector.load %arg3[%c0_13, %c0_14, %c0_15] : memref<1x256x128xbf16, #tpu.memory_space<vmem>>, vector<1x256x128xbf16>
    %21 = vector.shape_cast %20 : vector<1x256x128xbf16> to vector<256x128xbf16>
    %cst_16 = arith.constant dense<0.000000e+00> : vector<8x128xf32>
    %22 = tpu.matmul %19, %21, %cst_16 {dimension_numbers = #tpu.dot_dimension_numbers<[1], [0], [0], [1], [0, 0, 1, 1], [], []>} : vector<8x256xbf16>, vector<256x128xbf16>, vector<8x128xf32> -> vector<8x128xf32>
    %c0_17 = arith.constant 0 : index
    %c0_18 = arith.constant 0 : index
    %c0_19 = arith.constant 0 : index
    %23 = vector.load %arg4[%c0_17, %c0_18, %c0_19] : memref<1x1x128xf32, #tpu.memory_space<vmem>>, vector<1x1x128xf32>
    %24 = vector.shape_cast %23 : vector<1x1x128xf32> to vector<1x128xf32>
    %25 = vector.broadcast %24 : vector<1x128xf32> to vector<8x128xf32>
    %26 = arith.addf %22, %25 : vector<8x128xf32>
    %27 = math.tanh %26 : vector<8x128xf32>
    %c1_20 = arith.constant 1 : index
    %c0_21 = arith.constant 0 : index
    %c0_22 = arith.constant 0 : index
    %28 = vector.load %arg6[%c1_20, %c0_21, %c0_22] : memref<2x8x128xf32, #tpu.memory_space<vmem>>, vector<1x8x128xf32>
    %29 = vector.shape_cast %28 : vector<1x8x128xf32> to vector<8x128xf32>
    %30 = vector.shape_cast %27 : vector<8x128xf32> to vector<1x8x128xf32>
    tpu.vector_store %arg6[%c1_20, %c0_21, %c0_22], %30 {strides = array<i32>} : memref<2x8x128xf32, #tpu.memory_space<vmem>>, vector<1x8x128xf32>,
    %31 = arith.index_cast %c0_i32_1 : i32 to index
    %c0_23 = arith.constant 0 : index
    %c0_24 = arith.constant 0 : index
    %32 = vector.load %arg5[%31, %c0_23, %c0_24] : memref<8x8x128xf32, #tpu.memory_space<vmem>>, vector<1x8x128xf32>
    %33 = vector.shape_cast %32 : vector<1x8x128xf32> to vector<8x128xf32>
    %34 = vector.shape_cast %27 : vector<8x128xf32> to vector<1x8x128xf32>
    tpu.vector_store %arg5[%31, %c0_23, %c0_24], %34 {strides = array<i32>} : memref<8x8x128xf32, #tpu.memory_space<vmem>>, vector<1x8x128xf32>,
    %c1_i32 = arith.constant 1 : i32
    %c0_25 = arith.constant 0 : index
    %c0_26 = arith.constant 0 : index
    %c0_27 = arith.constant 0 : index
    %35 = vector.load %arg6[%c0_25, %c0_26, %c0_27] : memref<2x8x128xf32, #tpu.memory_space<vmem>>, vector<1x8x128xf32>
    %36 = vector.shape_cast %35 : vector<1x8x128xf32> to vector<8x128xf32>
    %37 = arith.index_cast %c1_i32 : i32 to index
    %c0_28 = arith.constant 0 : index
    %c0_29 = arith.constant 0 : index
    %38 = vector.load %arg1[%37, %c0_28, %c0_29] : memref<8x8x128xf32, #tpu.memory_space<vmem>>, vector<1x8x128xf32>
    %39 = vector.shape_cast %38 : vector<1x8x128xf32> to vector<8x128xf32>
    %40 = arith.truncf %36 : vector<8x128xf32> to vector<8x128xbf16>
    %c0_30 = arith.constant 0 : index
    %c0_31 = arith.constant 0 : index
    %41 = vector.load %arg2[%c0_30, %c0_31] : memref<128x128xbf16, #tpu.memory_space<vmem>>, vector<128x128xbf16>
    %cst_32 = arith.constant dense<0.000000e+00> : vector<8x128xf32>
    %42 = tpu.matmul %40, %41, %cst_32 {dimension_numbers = #tpu.dot_dimension_numbers<[1], [0], [0], [1], [0, 0, 1, 1], [], []>} : vector<8x128xbf16>, vector<128x128xbf16>, vector<8x128xf32> -> vector<8x128xf32>
    %43 = arith.addf %39, %42 : vector<8x128xf32>
    %44 = math.tanh %43 : vector<8x128xf32>
    %c0_33 = arith.constant 0 : index
    %c0_34 = arith.constant 0 : index
    %c0_35 = arith.constant 0 : index
    %45 = vector.load %arg6[%c0_33, %c0_34, %c0_35] : memref<2x8x128xf32, #tpu.memory_space<vmem>>, vector<1x8x128xf32>
    %46 = vector.shape_cast %45 : vector<1x8x128xf32> to vector<8x128xf32>
    %47 = vector.shape_cast %44 : vector<8x128xf32> to vector<1x8x128xf32>
    tpu.vector_store %arg6[%c0_33, %c0_34, %c0_35], %47 {strides = array<i32>} : memref<2x8x128xf32, #tpu.memory_space<vmem>>, vector<1x8x128xf32>,
    %c1_36 = arith.constant 1 : index
    %c0_37 = arith.constant 0 : index
    %c0_38 = arith.constant 0 : index
    %48 = vector.load %arg6[%c1_36, %c0_37, %c0_38] : memref<2x8x128xf32, #tpu.memory_space<vmem>>, vector<1x8x128xf32>
    %49 = vector.shape_cast %48 : vector<1x8x128xf32> to vector<8x128xf32>
    %50 = tpu.concatenate %44, %49 in 1 : vector<8x128xf32>, vector<8x128xf32> -> vector<8x256xf32>
    %51 = arith.truncf %50 : vector<8x256xf32> to vector<8x256xbf16>
    %c0_39 = arith.constant 0 : index
    %c0_40 = arith.constant 0 : index
    %c0_41 = arith.constant 0 : index
    %52 = vector.load %arg3[%c0_39, %c0_40, %c0_41] : memref<1x256x128xbf16, #tpu.memory_space<vmem>>, vector<1x256x128xbf16>
    %53 = vector.shape_cast %52 : vector<1x256x128xbf16> to vector<256x128xbf16>
    %cst_42 = arith.constant dense<0.000000e+00> : vector<8x128xf32>
    %54 = tpu.matmul %51, %53, %cst_42 {dimension_numbers = #tpu.dot_dimension_numbers<[1], [0], [0], [1], [0, 0, 1, 1], [], []>} : vector<8x256xbf16>, vector<256x128xbf16>, vector<8x128xf32> -> vector<8x128xf32>
    %c0_43 = arith.constant 0 : index
    %c0_44 = arith.constant 0 : index
    %c0_45 = arith.constant 0 : index
    %55 = vector.load %arg4[%c0_43, %c0_44, %c0_45] : memref<1x1x128xf32, #tpu.memory_space<vmem>>, vector<1x1x128xf32>
    %56 = vector.shape_cast %55 : vector<1x1x128xf32> to vector<1x128xf32>
    %57 = vector.broadcast %56 : vector<1x128xf32> to vector<8x128xf32>
    %58 = arith.addf %54, %57 : vector<8x128xf32>
    %59 = math.tanh %58 : vector<8x128xf32>
    %c1_46 = arith.constant 1 : index
    %c0_47 = arith.constant 0 : index
    %c0_48 = arith.constant 0 : index
    %60 = vector.load %arg6[%c1_46, %c0_47, %c0_48] : memref<2x8x128xf32, #tpu.memory_space<vmem>>, vector<1x8x128xf32>
    %61 = vector.shape_cast %60 : vector<1x8x128xf32> to vector<8x128xf32>
    %62 = vector.shape_cast %59 : vector<8x128xf32> to vector<1x8x128xf32>
    tpu.vector_store %arg6[%c1_46, %c0_47, %c0_48], %62 {strides = array<i32>} : memref<2x8x128xf32, #tpu.memory_space<vmem>>, vector<1x8x128xf32>,
    %63 = arith.index_cast %c1_i32 : i32 to index
    %c0_49 = arith.constant 0 : index
    %c0_50 = arith.constant 0 : index
    %64 = vector.load %arg5[%63, %c0_49, %c0_50] : memref<8x8x128xf32, #tpu.memory_space<vmem>>, vector<1x8x128xf32>
    %65 = vector.shape_cast %64 : vector<1x8x128xf32> to vector<8x128xf32>
    %66 = vector.shape_cast %59 : vector<8x128xf32> to vector<1x8x128xf32>
    tpu.vector_store %arg5[%63, %c0_49, %c0_50], %66 {strides = array<i32>} : memref<8x8x128xf32, #tpu.memory_space<vmem>>, vector<1x8x128xf32>,
    %c2_i32 = arith.constant 2 : i32
    %c0_51 = arith.constant 0 : index
    %c0_52 = arith.constant 0 : index
    %c0_53 = arith.constant 0 : index
    %67 = vector.load %arg6[%c0_51, %c0_52, %c0_53] : memref<2x8x128xf32, #tpu.memory_space<vmem>>, vector<1x8x128xf32>
    %68 = vector.shape_cast %67 : vector<1x8x128xf32> to vector<8x128xf32>
    %69 = arith.index_cast %c2_i32 : i32 to index
    %c0_54 = arith.constant 0 : index
    %c0_55 = arith.constant 0 : index
    %70 = vector.load %arg1[%69, %c0_54, %c0_55] : memref<8x8x128xf32, #tpu.memory_space<vmem>>, vector<1x8x128xf32>
    %71 = vector.shape_cast %70 : vector<1x8x128xf32> to vector<8x128xf32>
    %72 = arith.truncf %68 : vector<8x128xf32> to vector<8x128xbf16>
    %c0_56 = arith.constant 0 : index
    %c0_57 = arith.constant 0 : index
    %73 = vector.load %arg2[%c0_56, %c0_57] : memref<128x128xbf16, #tpu.memory_space<vmem>>, vector<128x128xbf16>
    %cst_58 = arith.constant dense<0.000000e+00> : vector<8x128xf32>
    %74 = tpu.matmul %72, %73, %cst_58 {dimension_numbers = #tpu.dot_dimension_numbers<[1], [0], [0], [1], [0, 0, 1, 1], [], []>} : vector<8x128xbf16>, vector<128x128xbf16>, vector<8x128xf32> -> vector<8x128xf32>
    %75 = arith.addf %71, %74 : vector<8x128xf32>
    %76 = math.tanh %75 : vector<8x128xf32>
    %c0_59 = arith.constant 0 : index
    %c0_60 = arith.constant 0 : index
    %c0_61 = arith.constant 0 : index
    %77 = vector.load %arg6[%c0_59, %c0_60, %c0_61] : memref<2x8x128xf32, #tpu.memory_space<vmem>>, vector<1x8x128xf32>
    %78 = vector.shape_cast %77 : vector<1x8x128xf32> to vector<8x128xf32>
    %79 = vector.shape_cast %76 : vector<8x128xf32> to vector<1x8x128xf32>
    tpu.vector_store %arg6[%c0_59, %c0_60, %c0_61], %79 {strides = array<i32>} : memref<2x8x128xf32, #tpu.memory_space<vmem>>, vector<1x8x128xf32>,
    %c1_62 = arith.constant 1 : index
    %c0_63 = arith.constant 0 : index
    %c0_64 = arith.constant 0 : index
    %80 = vector.load %arg6[%c1_62, %c0_63, %c0_64] : memref<2x8x128xf32, #tpu.memory_space<vmem>>, vector<1x8x128xf32>
    %81 = vector.shape_cast %80 : vector<1x8x128xf32> to vector<8x128xf32>
    %82 = tpu.concatenate %76, %81 in 1 : vector<8x128xf32>, vector<8x128xf32> -> vector<8x256xf32>
    %83 = arith.truncf %82 : vector<8x256xf32> to vector<8x256xbf16>
    %c0_65 = arith.constant 0 : index
    %c0_66 = arith.constant 0 : index
    %c0_67 = arith.constant 0 : index
    %84 = vector.load %arg3[%c0_65, %c0_66, %c0_67] : memref<1x256x128xbf16, #tpu.memory_space<vmem>>, vector<1x256x128xbf16>
    %85 = vector.shape_cast %84 : vector<1x256x128xbf16> to vector<256x128xbf16>
    %cst_68 = arith.constant dense<0.000000e+00> : vector<8x128xf32>
    %86 = tpu.matmul %83, %85, %cst_68 {dimension_numbers = #tpu.dot_dimension_numbers<[1], [0], [0], [1], [0, 0, 1, 1], [], []>} : vector<8x256xbf16>, vector<256x128xbf16>, vector<8x128xf32> -> vector<8x128xf32>
    %c0_69 = arith.constant 0 : index
    %c0_70 = arith.constant 0 : index
    %c0_71 = arith.constant 0 : index
    %87 = vector.load %arg4[%c0_69, %c0_70, %c0_71] : memref<1x1x128xf32, #tpu.memory_space<vmem>>, vector<1x1x128xf32>
    %88 = vector.shape_cast %87 : vector<1x1x128xf32> to vector<1x128xf32>
    %89 = vector.broadcast %88 : vector<1x128xf32> to vector<8x128xf32>
    %90 = arith.addf %86, %89 : vector<8x128xf32>
    %91 = math.tanh %90 : vector<8x128xf32>
    %c1_72 = arith.constant 1 : index
    %c0_73 = arith.constant 0 : index
    %c0_74 = arith.constant 0 : index
    %92 = vector.load %arg6[%c1_72, %c0_73, %c0_74] : memref<2x8x128xf32, #tpu.memory_space<vmem>>, vector<1x8x128xf32>
    %93 = vector.shape_cast %92 : vector<1x8x128xf32> to vector<8x128xf32>
    %94 = vector.shape_cast %91 : vector<8x128xf32> to vector<1x8x128xf32>
    tpu.vector_store %arg6[%c1_72, %c0_73, %c0_74], %94 {strides = array<i32>} : memref<2x8x128xf32, #tpu.memory_space<vmem>>, vector<1x8x128xf32>,
    %95 = arith.index_cast %c2_i32 : i32 to index
    %c0_75 = arith.constant 0 : index
    %c0_76 = arith.constant 0 : index
    %96 = vector.load %arg5[%95, %c0_75, %c0_76] : memref<8x8x128xf32, #tpu.memory_space<vmem>>, vector<1x8x128xf32>
    %97 = vector.shape_cast %96 : vector<1x8x128xf32> to vector<8x128xf32>
    %98 = vector.shape_cast %91 : vector<8x128xf32> to vector<1x8x128xf32>
    tpu.vector_store %arg5[%95, %c0_75, %c0_76], %98 {strides = array<i32>} : memref<8x8x128xf32, #tpu.memory_space<vmem>>, vector<1x8x128xf32>,
    %c3_i32 = arith.constant 3 : i32
    %c0_77 = arith.constant 0 : index
    %c0_78 = arith.constant 0 : index
    %c0_79 = arith.constant 0 : index
    %99 = vector.load %arg6[%c0_77, %c0_78, %c0_79] : memref<2x8x128xf32, #tpu.memory_space<vmem>>, vector<1x8x128xf32>
    %100 = vector.shape_cast %99 : vector<1x8x128xf32> to vector<8x128xf32>
    %101 = arith.index_cast %c3_i32 : i32 to index
    %c0_80 = arith.constant 0 : index
    %c0_81 = arith.constant 0 : index
    %102 = vector.load %arg1[%101, %c0_80, %c0_81] : memref<8x8x128xf32, #tpu.memory_space<vmem>>, vector<1x8x128xf32>
    %103 = vector.shape_cast %102 : vector<1x8x128xf32> to vector<8x128xf32>
    %104 = arith.truncf %100 : vector<8x128xf32> to vector<8x128xbf16>
    %c0_82 = arith.constant 0 : index
    %c0_83 = arith.constant 0 : index
    %105 = vector.load %arg2[%c0_82, %c0_83] : memref<128x128xbf16, #tpu.memory_space<vmem>>, vector<128x128xbf16>
    %cst_84 = arith.constant dense<0.000000e+00> : vector<8x128xf32>
    %106 = tpu.matmul %104, %105, %cst_84 {dimension_numbers = #tpu.dot_dimension_numbers<[1], [0], [0], [1], [0, 0, 1, 1], [], []>} : vector<8x128xbf16>, vector<128x128xbf16>, vector<8x128xf32> -> vector<8x128xf32>
    %107 = arith.addf %103, %106 : vector<8x128xf32>
    %108 = math.tanh %107 : vector<8x128xf32>
    %c0_85 = arith.constant 0 : index
    %c0_86 = arith.constant 0 : index
    %c0_87 = arith.constant 0 : index
    %109 = vector.load %arg6[%c0_85, %c0_86, %c0_87] : memref<2x8x128xf32, #tpu.memory_space<vmem>>, vector<1x8x128xf32>
    %110 = vector.shape_cast %109 : vector<1x8x128xf32> to vector<8x128xf32>
    %111 = vector.shape_cast %108 : vector<8x128xf32> to vector<1x8x128xf32>
    tpu.vector_store %arg6[%c0_85, %c0_86, %c0_87], %111 {strides = array<i32>} : memref<2x8x128xf32, #tpu.memory_space<vmem>>, vector<1x8x128xf32>,
    %c1_88 = arith.constant 1 : index
    %c0_89 = arith.constant 0 : index
    %c0_90 = arith.constant 0 : index
    %112 = vector.load %arg6[%c1_88, %c0_89, %c0_90] : memref<2x8x128xf32, #tpu.memory_space<vmem>>, vector<1x8x128xf32>
    %113 = vector.shape_cast %112 : vector<1x8x128xf32> to vector<8x128xf32>
    %114 = tpu.concatenate %108, %113 in 1 : vector<8x128xf32>, vector<8x128xf32> -> vector<8x256xf32>
    %115 = arith.truncf %114 : vector<8x256xf32> to vector<8x256xbf16>
    %c0_91 = arith.constant 0 : index
    %c0_92 = arith.constant 0 : index
    %c0_93 = arith.constant 0 : index
    %116 = vector.load %arg3[%c0_91, %c0_92, %c0_93] : memref<1x256x128xbf16, #tpu.memory_space<vmem>>, vector<1x256x128xbf16>
    %117 = vector.shape_cast %116 : vector<1x256x128xbf16> to vector<256x128xbf16>
    %cst_94 = arith.constant dense<0.000000e+00> : vector<8x128xf32>
    %118 = tpu.matmul %115, %117, %cst_94 {dimension_numbers = #tpu.dot_dimension_numbers<[1], [0], [0], [1], [0, 0, 1, 1], [], []>} : vector<8x256xbf16>, vector<256x128xbf16>, vector<8x128xf32> -> vector<8x128xf32>
    %c0_95 = arith.constant 0 : index
    %c0_96 = arith.constant 0 : index
    %c0_97 = arith.constant 0 : index
    %119 = vector.load %arg4[%c0_95, %c0_96, %c0_97] : memref<1x1x128xf32, #tpu.memory_space<vmem>>, vector<1x1x128xf32>
    %120 = vector.shape_cast %119 : vector<1x1x128xf32> to vector<1x128xf32>
    %121 = vector.broadcast %120 : vector<1x128xf32> to vector<8x128xf32>
    %122 = arith.addf %118, %121 : vector<8x128xf32>
    %123 = math.tanh %122 : vector<8x128xf32>
    %c1_98 = arith.constant 1 : index
    %c0_99 = arith.constant 0 : index
    %c0_100 = arith.constant 0 : index
    %124 = vector.load %arg6[%c1_98, %c0_99, %c0_100] : memref<2x8x128xf32, #tpu.memory_space<vmem>>, vector<1x8x128xf32>
    %125 = vector.shape_cast %124 : vector<1x8x128xf32> to vector<8x128xf32>
    %126 = vector.shape_cast %123 : vector<8x128xf32> to vector<1x8x128xf32>
    tpu.vector_store %arg6[%c1_98, %c0_99, %c0_100], %126 {strides = array<i32>} : memref<2x8x128xf32, #tpu.memory_space<vmem>>, vector<1x8x128xf32>,
    %127 = arith.index_cast %c3_i32 : i32 to index
    %c0_101 = arith.constant 0 : index
    %c0_102 = arith.constant 0 : index
    %128 = vector.load %arg5[%127, %c0_101, %c0_102] : memref<8x8x128xf32, #tpu.memory_space<vmem>>, vector<1x8x128xf32>
    %129 = vector.shape_cast %128 : vector<1x8x128xf32> to vector<8x128xf32>
    %130 = vector.shape_cast %123 : vector<8x128xf32> to vector<1x8x128xf32>
    tpu.vector_store %arg5[%127, %c0_101, %c0_102], %130 {strides = array<i32>} : memref<8x8x128xf32, #tpu.memory_space<vmem>>, vector<1x8x128xf32>,
    %c4_i32 = arith.constant 4 : i32
    %c0_103 = arith.constant 0 : index
    %c0_104 = arith.constant 0 : index
    %c0_105 = arith.constant 0 : index
    %131 = vector.load %arg6[%c0_103, %c0_104, %c0_105] : memref<2x8x128xf32, #tpu.memory_space<vmem>>, vector<1x8x128xf32>
    %132 = vector.shape_cast %131 : vector<1x8x128xf32> to vector<8x128xf32>
    %133 = arith.index_cast %c4_i32 : i32 to index
    %c0_106 = arith.constant 0 : index
    %c0_107 = arith.constant 0 : index
    %134 = vector.load %arg1[%133, %c0_106, %c0_107] : memref<8x8x128xf32, #tpu.memory_space<vmem>>, vector<1x8x128xf32>
    %135 = vector.shape_cast %134 : vector<1x8x128xf32> to vector<8x128xf32>
    %136 = arith.truncf %132 : vector<8x128xf32> to vector<8x128xbf16>
    %c0_108 = arith.constant 0 : index
    %c0_109 = arith.constant 0 : index
    %137 = vector.load %arg2[%c0_108, %c0_109] : memref<128x128xbf16, #tpu.memory_space<vmem>>, vector<128x128xbf16>
    %cst_110 = arith.constant dense<0.000000e+00> : vector<8x128xf32>
    %138 = tpu.matmul %136, %137, %cst_110 {dimension_numbers = #tpu.dot_dimension_numbers<[1], [0], [0], [1], [0, 0, 1, 1], [], []>} : vector<8x128xbf16>, vector<128x128xbf16>, vector<8x128xf32> -> vector<8x128xf32>
    %139 = arith.addf %135, %138 : vector<8x128xf32>
    %140 = math.tanh %139 : vector<8x128xf32>
    %c0_111 = arith.constant 0 : index
    %c0_112 = arith.constant 0 : index
    %c0_113 = arith.constant 0 : index
    %141 = vector.load %arg6[%c0_111, %c0_112, %c0_113] : memref<2x8x128xf32, #tpu.memory_space<vmem>>, vector<1x8x128xf32>
    %142 = vector.shape_cast %141 : vector<1x8x128xf32> to vector<8x128xf32>
    %143 = vector.shape_cast %140 : vector<8x128xf32> to vector<1x8x128xf32>
    tpu.vector_store %arg6[%c0_111, %c0_112, %c0_113], %143 {strides = array<i32>} : memref<2x8x128xf32, #tpu.memory_space<vmem>>, vector<1x8x128xf32>,
    %c1_114 = arith.constant 1 : index
    %c0_115 = arith.constant 0 : index
    %c0_116 = arith.constant 0 : index
    %144 = vector.load %arg6[%c1_114, %c0_115, %c0_116] : memref<2x8x128xf32, #tpu.memory_space<vmem>>, vector<1x8x128xf32>
    %145 = vector.shape_cast %144 : vector<1x8x128xf32> to vector<8x128xf32>
    %146 = tpu.concatenate %140, %145 in 1 : vector<8x128xf32>, vector<8x128xf32> -> vector<8x256xf32>
    %147 = arith.truncf %146 : vector<8x256xf32> to vector<8x256xbf16>
    %c0_117 = arith.constant 0 : index
    %c0_118 = arith.constant 0 : index
    %c0_119 = arith.constant 0 : index
    %148 = vector.load %arg3[%c0_117, %c0_118, %c0_119] : memref<1x256x128xbf16, #tpu.memory_space<vmem>>, vector<1x256x128xbf16>
    %149 = vector.shape_cast %148 : vector<1x256x128xbf16> to vector<256x128xbf16>
    %cst_120 = arith.constant dense<0.000000e+00> : vector<8x128xf32>
    %150 = tpu.matmul %147, %149, %cst_120 {dimension_numbers = #tpu.dot_dimension_numbers<[1], [0], [0], [1], [0, 0, 1, 1], [], []>} : vector<8x256xbf16>, vector<256x128xbf16>, vector<8x128xf32> -> vector<8x128xf32>
    %c0_121 = arith.constant 0 : index
    %c0_122 = arith.constant 0 : index
    %c0_123 = arith.constant 0 : index
    %151 = vector.load %arg4[%c0_121, %c0_122, %c0_123] : memref<1x1x128xf32, #tpu.memory_space<vmem>>, vector<1x1x128xf32>
    %152 = vector.shape_cast %151 : vector<1x1x128xf32> to vector<1x128xf32>
    %153 = vector.broadcast %152 : vector<1x128xf32> to vector<8x128xf32>
    %154 = arith.addf %150, %153 : vector<8x128xf32>
    %155 = math.tanh %154 : vector<8x128xf32>
    %c1_124 = arith.constant 1 : index
    %c0_125 = arith.constant 0 : index
    %c0_126 = arith.constant 0 : index
    %156 = vector.load %arg6[%c1_124, %c0_125, %c0_126] : memref<2x8x128xf32, #tpu.memory_space<vmem>>, vector<1x8x128xf32>
    %157 = vector.shape_cast %156 : vector<1x8x128xf32> to vector<8x128xf32>
    %158 = vector.shape_cast %155 : vector<8x128xf32> to vector<1x8x128xf32>
    tpu.vector_store %arg6[%c1_124, %c0_125, %c0_126], %158 {strides = array<i32>} : memref<2x8x128xf32, #tpu.memory_space<vmem>>, vector<1x8x128xf32>,
    %159 = arith.index_cast %c4_i32 : i32 to index
    %c0_127 = arith.constant 0 : index
    %c0_128 = arith.constant 0 : index
    %160 = vector.load %arg5[%159, %c0_127, %c0_128] : memref<8x8x128xf32, #tpu.memory_space<vmem>>, vector<1x8x128xf32>
    %161 = vector.shape_cast %160 : vector<1x8x128xf32> to vector<8x128xf32>
    %162 = vector.shape_cast %155 : vector<8x128xf32> to vector<1x8x128xf32>
    tpu.vector_store %arg5[%159, %c0_127, %c0_128], %162 {strides = array<i32>} : memref<8x8x128xf32, #tpu.memory_space<vmem>>, vector<1x8x128xf32>,
    %c5_i32 = arith.constant 5 : i32
    %c0_129 = arith.constant 0 : index
    %c0_130 = arith.constant 0 : index
    %c0_131 = arith.constant 0 : index
    %163 = vector.load %arg6[%c0_129, %c0_130, %c0_131] : memref<2x8x128xf32, #tpu.memory_space<vmem>>, vector<1x8x128xf32>
    %164 = vector.shape_cast %163 : vector<1x8x128xf32> to vector<8x128xf32>
    %165 = arith.index_cast %c5_i32 : i32 to index
    %c0_132 = arith.constant 0 : index
    %c0_133 = arith.constant 0 : index
    %166 = vector.load %arg1[%165, %c0_132, %c0_133] : memref<8x8x128xf32, #tpu.memory_space<vmem>>, vector<1x8x128xf32>
    %167 = vector.shape_cast %166 : vector<1x8x128xf32> to vector<8x128xf32>
    %168 = arith.truncf %164 : vector<8x128xf32> to vector<8x128xbf16>
    %c0_134 = arith.constant 0 : index
    %c0_135 = arith.constant 0 : index
    %169 = vector.load %arg2[%c0_134, %c0_135] : memref<128x128xbf16, #tpu.memory_space<vmem>>, vector<128x128xbf16>
    %cst_136 = arith.constant dense<0.000000e+00> : vector<8x128xf32>
    %170 = tpu.matmul %168, %169, %cst_136 {dimension_numbers = #tpu.dot_dimension_numbers<[1], [0], [0], [1], [0, 0, 1, 1], [], []>} : vector<8x128xbf16>, vector<128x128xbf16>, vector<8x128xf32> -> vector<8x128xf32>
    %171 = arith.addf %167, %170 : vector<8x128xf32>
    %172 = math.tanh %171 : vector<8x128xf32>
    %c0_137 = arith.constant 0 : index
    %c0_138 = arith.constant 0 : index
    %c0_139 = arith.constant 0 : index
    %173 = vector.load %arg6[%c0_137, %c0_138, %c0_139] : memref<2x8x128xf32, #tpu.memory_space<vmem>>, vector<1x8x128xf32>
    %174 = vector.shape_cast %173 : vector<1x8x128xf32> to vector<8x128xf32>
    %175 = vector.shape_cast %172 : vector<8x128xf32> to vector<1x8x128xf32>
    tpu.vector_store %arg6[%c0_137, %c0_138, %c0_139], %175 {strides = array<i32>} : memref<2x8x128xf32, #tpu.memory_space<vmem>>, vector<1x8x128xf32>,
    %c1_140 = arith.constant 1 : index
    %c0_141 = arith.constant 0 : index
    %c0_142 = arith.constant 0 : index
    %176 = vector.load %arg6[%c1_140, %c0_141, %c0_142] : memref<2x8x128xf32, #tpu.memory_space<vmem>>, vector<1x8x128xf32>
    %177 = vector.shape_cast %176 : vector<1x8x128xf32> to vector<8x128xf32>
    %178 = tpu.concatenate %172, %177 in 1 : vector<8x128xf32>, vector<8x128xf32> -> vector<8x256xf32>
    %179 = arith.truncf %178 : vector<8x256xf32> to vector<8x256xbf16>
    %c0_143 = arith.constant 0 : index
    %c0_144 = arith.constant 0 : index
    %c0_145 = arith.constant 0 : index
    %180 = vector.load %arg3[%c0_143, %c0_144, %c0_145] : memref<1x256x128xbf16, #tpu.memory_space<vmem>>, vector<1x256x128xbf16>
    %181 = vector.shape_cast %180 : vector<1x256x128xbf16> to vector<256x128xbf16>
    %cst_146 = arith.constant dense<0.000000e+00> : vector<8x128xf32>
    %182 = tpu.matmul %179, %181, %cst_146 {dimension_numbers = #tpu.dot_dimension_numbers<[1], [0], [0], [1], [0, 0, 1, 1], [], []>} : vector<8x256xbf16>, vector<256x128xbf16>, vector<8x128xf32> -> vector<8x128xf32>
    %c0_147 = arith.constant 0 : index
    %c0_148 = arith.constant 0 : index
    %c0_149 = arith.constant 0 : index
    %183 = vector.load %arg4[%c0_147, %c0_148, %c0_149] : memref<1x1x128xf32, #tpu.memory_space<vmem>>, vector<1x1x128xf32>
    %184 = vector.shape_cast %183 : vector<1x1x128xf32> to vector<1x128xf32>
    %185 = vector.broadcast %184 : vector<1x128xf32> to vector<8x128xf32>
    %186 = arith.addf %182, %185 : vector<8x128xf32>
    %187 = math.tanh %186 : vector<8x128xf32>
    %c1_150 = arith.constant 1 : index
    %c0_151 = arith.constant 0 : index
    %c0_152 = arith.constant 0 : index
    %188 = vector.load %arg6[%c1_150, %c0_151, %c0_152] : memref<2x8x128xf32, #tpu.memory_space<vmem>>, vector<1x8x128xf32>
    %189 = vector.shape_cast %188 : vector<1x8x128xf32> to vector<8x128xf32>
    %190 = vector.shape_cast %187 : vector<8x128xf32> to vector<1x8x128xf32>
    tpu.vector_store %arg6[%c1_150, %c0_151, %c0_152], %190 {strides = array<i32>} : memref<2x8x128xf32, #tpu.memory_space<vmem>>, vector<1x8x128xf32>,
    %191 = arith.index_cast %c5_i32 : i32 to index
    %c0_153 = arith.constant 0 : index
    %c0_154 = arith.constant 0 : index
    %192 = vector.load %arg5[%191, %c0_153, %c0_154] : memref<8x8x128xf32, #tpu.memory_space<vmem>>, vector<1x8x128xf32>
    %193 = vector.shape_cast %192 : vector<1x8x128xf32> to vector<8x128xf32>
    %194 = vector.shape_cast %187 : vector<8x128xf32> to vector<1x8x128xf32>
    tpu.vector_store %arg5[%191, %c0_153, %c0_154], %194 {strides = array<i32>} : memref<8x8x128xf32, #tpu.memory_space<vmem>>, vector<1x8x128xf32>,
    %c6_i32 = arith.constant 6 : i32
    %c0_155 = arith.constant 0 : index
    %c0_156 = arith.constant 0 : index
    %c0_157 = arith.constant 0 : index
    %195 = vector.load %arg6[%c0_155, %c0_156, %c0_157] : memref<2x8x128xf32, #tpu.memory_space<vmem>>, vector<1x8x128xf32>
    %196 = vector.shape_cast %195 : vector<1x8x128xf32> to vector<8x128xf32>
    %197 = arith.index_cast %c6_i32 : i32 to index
    %c0_158 = arith.constant 0 : index
    %c0_159 = arith.constant 0 : index
    %198 = vector.load %arg1[%197, %c0_158, %c0_159] : memref<8x8x128xf32, #tpu.memory_space<vmem>>, vector<1x8x128xf32>
    %199 = vector.shape_cast %198 : vector<1x8x128xf32> to vector<8x128xf32>
    %200 = arith.truncf %196 : vector<8x128xf32> to vector<8x128xbf16>
    %c0_160 = arith.constant 0 : index
    %c0_161 = arith.constant 0 : index
    %201 = vector.load %arg2[%c0_160, %c0_161] : memref<128x128xbf16, #tpu.memory_space<vmem>>, vector<128x128xbf16>
    %cst_162 = arith.constant dense<0.000000e+00> : vector<8x128xf32>
    %202 = tpu.matmul %200, %201, %cst_162 {dimension_numbers = #tpu.dot_dimension_numbers<[1], [0], [0], [1], [0, 0, 1, 1], [], []>} : vector<8x128xbf16>, vector<128x128xbf16>, vector<8x128xf32> -> vector<8x128xf32>
    %203 = arith.addf %199, %202 : vector<8x128xf32>
    %204 = math.tanh %203 : vector<8x128xf32>
    %c0_163 = arith.constant 0 : index
    %c0_164 = arith.constant 0 : index
    %c0_165 = arith.constant 0 : index
    %205 = vector.load %arg6[%c0_163, %c0_164, %c0_165] : memref<2x8x128xf32, #tpu.memory_space<vmem>>, vector<1x8x128xf32>
    %206 = vector.shape_cast %205 : vector<1x8x128xf32> to vector<8x128xf32>
    %207 = vector.shape_cast %204 : vector<8x128xf32> to vector<1x8x128xf32>
    tpu.vector_store %arg6[%c0_163, %c0_164, %c0_165], %207 {strides = array<i32>} : memref<2x8x128xf32, #tpu.memory_space<vmem>>, vector<1x8x128xf32>,
    %c1_166 = arith.constant 1 : index
    %c0_167 = arith.constant 0 : index
    %c0_168 = arith.constant 0 : index
    %208 = vector.load %arg6[%c1_166, %c0_167, %c0_168] : memref<2x8x128xf32, #tpu.memory_space<vmem>>, vector<1x8x128xf32>
    %209 = vector.shape_cast %208 : vector<1x8x128xf32> to vector<8x128xf32>
    %210 = tpu.concatenate %204, %209 in 1 : vector<8x128xf32>, vector<8x128xf32> -> vector<8x256xf32>
    %211 = arith.truncf %210 : vector<8x256xf32> to vector<8x256xbf16>
    %c0_169 = arith.constant 0 : index
    %c0_170 = arith.constant 0 : index
    %c0_171 = arith.constant 0 : index
    %212 = vector.load %arg3[%c0_169, %c0_170, %c0_171] : memref<1x256x128xbf16, #tpu.memory_space<vmem>>, vector<1x256x128xbf16>
    %213 = vector.shape_cast %212 : vector<1x256x128xbf16> to vector<256x128xbf16>
    %cst_172 = arith.constant dense<0.000000e+00> : vector<8x128xf32>
    %214 = tpu.matmul %211, %213, %cst_172 {dimension_numbers = #tpu.dot_dimension_numbers<[1], [0], [0], [1], [0, 0, 1, 1], [], []>} : vector<8x256xbf16>, vector<256x128xbf16>, vector<8x128xf32> -> vector<8x128xf32>
    %c0_173 = arith.constant 0 : index
    %c0_174 = arith.constant 0 : index
    %c0_175 = arith.constant 0 : index
    %215 = vector.load %arg4[%c0_173, %c0_174, %c0_175] : memref<1x1x128xf32, #tpu.memory_space<vmem>>, vector<1x1x128xf32>
    %216 = vector.shape_cast %215 : vector<1x1x128xf32> to vector<1x128xf32>
    %217 = vector.broadcast %216 : vector<1x128xf32> to vector<8x128xf32>
    %218 = arith.addf %214, %217 : vector<8x128xf32>
    %219 = math.tanh %218 : vector<8x128xf32>
    %c1_176 = arith.constant 1 : index
    %c0_177 = arith.constant 0 : index
    %c0_178 = arith.constant 0 : index
    %220 = vector.load %arg6[%c1_176, %c0_177, %c0_178] : memref<2x8x128xf32, #tpu.memory_space<vmem>>, vector<1x8x128xf32>
    %221 = vector.shape_cast %220 : vector<1x8x128xf32> to vector<8x128xf32>
    %222 = vector.shape_cast %219 : vector<8x128xf32> to vector<1x8x128xf32>
    tpu.vector_store %arg6[%c1_176, %c0_177, %c0_178], %222 {strides = array<i32>} : memref<2x8x128xf32, #tpu.memory_space<vmem>>, vector<1x8x128xf32>,
    %223 = arith.index_cast %c6_i32 : i32 to index
    %c0_179 = arith.constant 0 : index
    %c0_180 = arith.constant 0 : index
    %224 = vector.load %arg5[%223, %c0_179, %c0_180] : memref<8x8x128xf32, #tpu.memory_space<vmem>>, vector<1x8x128xf32>
    %225 = vector.shape_cast %224 : vector<1x8x128xf32> to vector<8x128xf32>
    %226 = vector.shape_cast %219 : vector<8x128xf32> to vector<1x8x128xf32>
    tpu.vector_store %arg5[%223, %c0_179, %c0_180], %226 {strides = array<i32>} : memref<8x8x128xf32, #tpu.memory_space<vmem>>, vector<1x8x128xf32>,
    %c7_i32 = arith.constant 7 : i32
    %c0_181 = arith.constant 0 : index
    %c0_182 = arith.constant 0 : index
    %c0_183 = arith.constant 0 : index
    %227 = vector.load %arg6[%c0_181, %c0_182, %c0_183] : memref<2x8x128xf32, #tpu.memory_space<vmem>>, vector<1x8x128xf32>
    %228 = vector.shape_cast %227 : vector<1x8x128xf32> to vector<8x128xf32>
    %229 = arith.index_cast %c7_i32 : i32 to index
    %c0_184 = arith.constant 0 : index
    %c0_185 = arith.constant 0 : index
    %230 = vector.load %arg1[%229, %c0_184, %c0_185] : memref<8x8x128xf32, #tpu.memory_space<vmem>>, vector<1x8x128xf32>
    %231 = vector.shape_cast %230 : vector<1x8x128xf32> to vector<8x128xf32>
    %232 = arith.truncf %228 : vector<8x128xf32> to vector<8x128xbf16>
    %c0_186 = arith.constant 0 : index
    %c0_187 = arith.constant 0 : index
    %233 = vector.load %arg2[%c0_186, %c0_187] : memref<128x128xbf16, #tpu.memory_space<vmem>>, vector<128x128xbf16>
    %cst_188 = arith.constant dense<0.000000e+00> : vector<8x128xf32>
    %234 = tpu.matmul %232, %233, %cst_188 {dimension_numbers = #tpu.dot_dimension_numbers<[1], [0], [0], [1], [0, 0, 1, 1], [], []>} : vector<8x128xbf16>, vector<128x128xbf16>, vector<8x128xf32> -> vector<8x128xf32>
    %235 = arith.addf %231, %234 : vector<8x128xf32>
    %236 = math.tanh %235 : vector<8x128xf32>
    %c0_189 = arith.constant 0 : index
    %c0_190 = arith.constant 0 : index
    %c0_191 = arith.constant 0 : index
    %237 = vector.load %arg6[%c0_189, %c0_190, %c0_191] : memref<2x8x128xf32, #tpu.memory_space<vmem>>, vector<1x8x128xf32>
    %238 = vector.shape_cast %237 : vector<1x8x128xf32> to vector<8x128xf32>
    %239 = vector.shape_cast %236 : vector<8x128xf32> to vector<1x8x128xf32>
    tpu.vector_store %arg6[%c0_189, %c0_190, %c0_191], %239 {strides = array<i32>} : memref<2x8x128xf32, #tpu.memory_space<vmem>>, vector<1x8x128xf32>,
    %c1_192 = arith.constant 1 : index
    %c0_193 = arith.constant 0 : index
    %c0_194 = arith.constant 0 : index
    %240 = vector.load %arg6[%c1_192, %c0_193, %c0_194] : memref<2x8x128xf32, #tpu.memory_space<vmem>>, vector<1x8x128xf32>
    %241 = vector.shape_cast %240 : vector<1x8x128xf32> to vector<8x128xf32>
    %242 = tpu.concatenate %236, %241 in 1 : vector<8x128xf32>, vector<8x128xf32> -> vector<8x256xf32>
    %243 = arith.truncf %242 : vector<8x256xf32> to vector<8x256xbf16>
    %c0_195 = arith.constant 0 : index
    %c0_196 = arith.constant 0 : index
    %c0_197 = arith.constant 0 : index
    %244 = vector.load %arg3[%c0_195, %c0_196, %c0_197] : memref<1x256x128xbf16, #tpu.memory_space<vmem>>, vector<1x256x128xbf16>
    %245 = vector.shape_cast %244 : vector<1x256x128xbf16> to vector<256x128xbf16>
    %cst_198 = arith.constant dense<0.000000e+00> : vector<8x128xf32>
    %246 = tpu.matmul %243, %245, %cst_198 {dimension_numbers = #tpu.dot_dimension_numbers<[1], [0], [0], [1], [0, 0, 1, 1], [], []>} : vector<8x256xbf16>, vector<256x128xbf16>, vector<8x128xf32> -> vector<8x128xf32>
    %c0_199 = arith.constant 0 : index
    %c0_200 = arith.constant 0 : index
    %c0_201 = arith.constant 0 : index
    %247 = vector.load %arg4[%c0_199, %c0_200, %c0_201] : memref<1x1x128xf32, #tpu.memory_space<vmem>>, vector<1x1x128xf32>
    %248 = vector.shape_cast %247 : vector<1x1x128xf32> to vector<1x128xf32>
    %249 = vector.broadcast %248 : vector<1x128xf32> to vector<8x128xf32>
    %250 = arith.addf %246, %249 : vector<8x128xf32>
    %251 = math.tanh %250 : vector<8x128xf32>
    %c1_202 = arith.constant 1 : index
    %c0_203 = arith.constant 0 : index
    %c0_204 = arith.constant 0 : index
    %252 = vector.load %arg6[%c1_202, %c0_203, %c0_204] : memref<2x8x128xf32, #tpu.memory_space<vmem>>, vector<1x8x128xf32>
    %253 = vector.shape_cast %252 : vector<1x8x128xf32> to vector<8x128xf32>
    %254 = vector.shape_cast %251 : vector<8x128xf32> to vector<1x8x128xf32>
    tpu.vector_store %arg6[%c1_202, %c0_203, %c0_204], %254 {strides = array<i32>} : memref<2x8x128xf32, #tpu.memory_space<vmem>>, vector<1x8x128xf32>,
    %255 = arith.index_cast %c7_i32 : i32 to index
    %c0_205 = arith.constant 0 : index
    %c0_206 = arith.constant 0 : index
    %256 = vector.load %arg5[%255, %c0_205, %c0_206] : memref<8x8x128xf32, #tpu.memory_space<vmem>>, vector<1x8x128xf32>
    %257 = vector.shape_cast %256 : vector<1x8x128xf32> to vector<8x128xf32>
    %258 = vector.shape_cast %251 : vector<8x128xf32> to vector<1x8x128xf32>
    tpu.vector_store %arg5[%255, %c0_205, %c0_206], %258 {strides = array<i32>} : memref<8x8x128xf32, #tpu.memory_space<vmem>>, vector<1x8x128xf32>,
    %c8_i32 = arith.constant 8 : i32
    return
  }
  func.func @transform_0(%arg0: i32) -> (i32, i32, i32) {
    %c0_i32 = arith.constant 0 : i32
    %c0_i32_0 = arith.constant 0 : i32
    %c0_i32_1 = arith.constant 0 : i32
    return %arg0, %c0_i32, %c0_i32_0 : i32, i32, i32
  }
  func.func @transform_1(%arg0: i32) -> (i32, i32) {
    %c0_i32 = arith.constant 0 : i32
    %c0_i32_0 = arith.constant 0 : i32
    %c0_i32_1 = arith.constant 0 : i32
    return %c0_i32, %c0_i32_0 : i32, i32
  }
  func.func @transform_2(%arg0: i32) -> (i32, i32, i32) {
    %c0_i32 = arith.constant 0 : i32
    %c0_i32_0 = arith.constant 0 : i32
    %c0_i32_1 = arith.constant 0 : i32
    %c0_i32_2 = arith.constant 0 : i32
    return %c0_i32, %c0_i32_0, %c0_i32_1 : i32, i32, i32
  }
  func.func @transform_3(%arg0: i32) -> (i32, i32, i32) {
    %c0_i32 = arith.constant 0 : i32
    %c0_i32_0 = arith.constant 0 : i32
    %c0_i32_1 = arith.constant 0 : i32
    %c0_i32_2 = arith.constant 0 : i32
    return %c0_i32, %c0_i32_0, %c0_i32_1 : i32, i32, i32
  }
  func.func @transform_4(%arg0: i32) -> (i32, i32, i32) {
    %c0_i32 = arith.constant 0 : i32
    %c0_i32_0 = arith.constant 0 : i32
    %c0_i32_1 = arith.constant 0 : i32
    return %arg0, %c0_i32, %c0_i32_0 : i32, i32, i32
  }
}

</mosaic_0001>

<llo_original>
// kernel: tpu_custom_call.1
$region0: #{tpu_custom_call.1}
  #allocation0 [shape = 'u32[]', space=smem, size = 0x4, offset = 0x4, fixed_abs, tag = 'smem constant byte address 0x4 - core index']
  #allocation1 [shape = 'u32[144,128]{1,0:T(1,128)}', space=vmem, size = 0x12000, scoped, tag = 'internal scratch']
  #allocation2 [shape = 'f32[2,8,128]{2,1,0:T(8,128)}', space=vmem, size = 0x2000, scoped, tag = 'scratch operand']
  %s0 = inlined_call_operand.hbm [shape: f32[8,8,128], index: 0, kind: input, shape index: {}]
  %s1 = inlined_call_operand.hbm [shape: bf16[128,128], index: 1, kind: input, shape index: {}]
  %s2 = inlined_call_operand.hbm [shape: bf16[1,256,128], index: 2, kind: input, shape index: {}]
  %s3 = inlined_call_operand.vmem [shape: f32[1,1,128], index: 3, kind: input, shape index: {}]
  %s4 = inlined_call_operand.hbm [shape: f32[8,8,128], index: 4, kind: output, shape index: {}]
  %s5 = sld [smem:[#allocation0]]
  $region42: #{tpu_custom_call.1} parent=0
    _
  %s7 = ssub.s32 1, %s5
  %s8 = scalar_select 0, %s7, %s5
  $region1: #{tpu_custom_call.1} parent=0
    #allocation3 [shape = 'u8[32768]{0}', space=vmem, size = 0x8000, scoped, tag = 'input window, operand 0, single buffered']
    #allocation4 [shape = 's32[1]{0}', space=sflag, size = 0x4, scoped, tag = 'scoped memory for tpu_custom_call.1']
    #allocation5 [shape = 's32[1]{0}', space=sflag, size = 0x4, scoped, tag = 'scoped memory for tpu_custom_call.1']
    #allocation6 [shape = 'u8[32768]{0}', space=vmem, size = 0x8000, scoped, tag = 'input window, operand 1, single buffered']
    #allocation7 [shape = 's32[1]{0}', space=sflag, size = 0x4, scoped, tag = 'scoped memory for tpu_custom_call.1']
    #allocation8 [shape = 'u8[65536]{0}', space=vmem, size = 0x10000, scoped, tag = 'input window, operand 2, single buffered']
    #allocation9 [shape = 'u8[32768]{0}', space=vmem, size = 0x8000, scoped, tag = 'output window, operand 0, single buffered']
    %9 = vsyncpa [#allocation4], 0
    %10 = vsyncpa [#allocation7], 0
    %11 = vsyncpa [#allocation5], 0
    // Predicated region
    $region2: #{tpu_custom_call.1} parent=1 // pred_check
      _
    $region3: #{tpu_custom_call.1} parent=1 // pred_check_branch
      %13 = sbr.rel (0) target = $region5
    $region4: #{tpu_custom_call.1} parent=1 // pred_region
      %s15 = ssub.s32 1024, 1024
      %16 = vsyncadd [#allocation4], %s15
      %s17 = sshll.u32 [#allocation3], 4
      %s18 = int_to_ptr.vmem [resolvable:$true] %s17
      %23 = dma.hbm_to_vmem [thread:$0]  %s0, 1024, %s18, [#allocation4], 128, 128, 8
    $region5: #{tpu_custom_call.1} parent=1 // pred_fallthru
      _
    // Predicated region
    $region6: #{tpu_custom_call.1} parent=1 // pred_check
      _
    $region7: #{tpu_custom_call.1} parent=1 // pred_check_branch
      %25 = sbr.rel (0) target = $region9
    $region8: #{tpu_custom_call.1} parent=1 // pred_region
      %s27 = ssub.s32 1024, 1024
      %28 = vsyncadd [#allocation7], %s27
      %s29 = sshll.u32 [#allocation6], 4
      %s30 = int_to_ptr.vmem [resolvable:$true] %s29
      %35 = dma.hbm_to_vmem [thread:$0]  %s1, 1024, %s30, [#allocation7], 64, 64, 4
    $region9: #{tpu_custom_call.1} parent=1 // pred_fallthru
      _
    // Predicated region
    $region10: #{tpu_custom_call.1} parent=1 // pred_check
      _
    $region11: #{tpu_custom_call.1} parent=1 // pred_check_branch
      %37 = sbr.rel (0) target = $region13
    $region12: #{tpu_custom_call.1} parent=1 // pred_region
      %s39 = ssub.s32 2048, 2048
      %40 = vsyncadd [#allocation7], %s39
      %s41 = sshll.u32 [#allocation8], 4
      %s42 = int_to_ptr.vmem [resolvable:$true] %s41
      %47 = dma.hbm_to_vmem [thread:$0]  %s2, 2048, %s42, [#allocation7], 64, 64, 4
    $region13: #{tpu_custom_call.1} parent=1 // pred_fallthru
      _
    // Predicated region
    $region14: #{tpu_custom_call.1} parent=1 // pred_check
      _
    $region15: #{tpu_custom_call.1} parent=1 // pred_check_branch
      %49 = sbr.rel (0) target = $region17
    $region16: #{tpu_custom_call.1} parent=1 // pred_region
      _
    $region17: #{tpu_custom_call.1} parent=1 // pred_fallthru
      _
    // Predicated region
    $region18: #{tpu_custom_call.1} parent=1 // pred_check
      _
    $region19: #{tpu_custom_call.1} parent=1 // pred_check_branch
      %51 = sbr.rel (0) target = $region21
    $region20: #{tpu_custom_call.1} parent=1 // pred_region
      %52 = dma.done [#allocation4], 1024
    $region21: #{tpu_custom_call.1} parent=1 // pred_fallthru
      _
    // Predicated region
    $region22: #{tpu_custom_call.1} parent=1 // pred_check
      _
    $region23: #{tpu_custom_call.1} parent=1 // pred_check_branch
      %54 = sbr.rel (0) target = $region25
    $region24: #{tpu_custom_call.1} parent=1 // pred_region
      %55 = dma.done [#allocation7], 1024
    $region25: #{tpu_custom_call.1} parent=1 // pred_fallthru
      _
    // Predicated region
    $region26: #{tpu_custom_call.1} parent=1 // pred_check
      _
    $region27: #{tpu_custom_call.1} parent=1 // pred_check_branch
      %57 = sbr.rel (0) target = $region29
    $region28: #{tpu_custom_call.1} parent=1 // pred_region
      %58 = dma.done [#allocation7], 2048
    $region29: #{tpu_custom_call.1} parent=1 // pred_fallthru
      _
    %p60 = scmp.eq.s32.totalorder 0, 0
    // Predicated region
    $region30: #{tpu_custom_call.1} parent=1 // pred_check
      %p61 = pneg %p60
    $region31: #{tpu_custom_call.1} parent=1 // pred_check_branch
      %63 = sbr.rel (%p61) target = $region33
    $region32: #{tpu_custom_call.1} parent=1 // pred_region
      %64 = vst [vmem:[#allocation2] sm:$0xff] 0.0
      %65 = vst [vmem:[#allocation2 + $0x8] sm:$0xff] 0.0
    $region33: #{tpu_custom_call.1} parent=1 // pred_fallthru
      _
    %v66 = vld [vmem:[#allocation2] sm:$0xff]
    %v67 = vld [vmem:[#allocation3] sm:$0xff]
    %v68 = vpack.c.bf16 %v66, %v66
    %v69 = vld [vmem:[#allocation6] sm:$0xf]
    %v70 = vld [vmem:[#allocation6 + $0x4] sm:$0xf]
    %v71 = vld [vmem:[#allocation6 + $0x8] sm:$0xf]
    %v72 = vld [vmem:[#allocation6 + $0xc] sm:$0xf]
    %v73 = vld [vmem:[#allocation6 + $0x10] sm:$0xf]
    %v74 = vld [vmem:[#allocation6 + $0x14] sm:$0xf]
    %v75 = vld [vmem:[#allocation6 + $0x18] sm:$0xf]
    %v76 = vld [vmem:[#allocation6 + $0x1c] sm:$0xf]
    %v77 = vld [vmem:[#allocation6 + $0x20] sm:$0xf]
    %v78 = vld [vmem:[#allocation6 + $0x24] sm:$0xf]
    %v79 = vld [vmem:[#allocation6 + $0x28] sm:$0xf]
    %v80 = vld [vmem:[#allocation6 + $0x2c] sm:$0xf]
    %v81 = vld [vmem:[#allocation6 + $0x30] sm:$0xf]
    %v82 = vld [vmem:[#allocation6 + $0x34] sm:$0xf]
    %v83 = vld [vmem:[#allocation6 + $0x38] sm:$0xf]
    %v84 = vld [vmem:[#allocation6 + $0x3c] sm:$0xf]
    %v101 = vunpack.c.l.b16 %v69
    %v102 = vunpack.c.l.b16 %v70
    %v103 = vunpack.c.l.b16 %v71
    %v104 = vunpack.c.l.b16 %v72
    %v105 = vunpack.c.l.b16 %v73
    %v106 = vunpack.c.l.b16 %v74
    %v107 = vunpack.c.l.b16 %v75
    %v108 = vunpack.c.l.b16 %v76
    %v109 = vunpack.c.l.b16 %v77
    %v110 = vunpack.c.l.b16 %v78
    %v111 = vunpack.c.l.b16 %v79
    %v112 = vunpack.c.l.b16 %v80
    %v113 = vunpack.c.l.b16 %v81
    %v114 = vunpack.c.l.b16 %v82
    %v115 = vunpack.c.l.b16 %v83
    %v116 = vunpack.c.l.b16 %v84
    %v117 = vpack.c.b16 %v102, %v101
    %v118 = vpack.c.b16 %v104, %v103
    %v119 = vpack.c.b16 %v106, %v105
    %v120 = vpack.c.b16 %v108, %v107
    %v121 = vpack.c.b16 %v110, %v109
    %v122 = vpack.c.b16 %v112, %v111
    %v123 = vpack.c.b16 %v114, %v113
    %v124 = vpack.c.b16 %v116, %v115
    %133 = vmatprep.subr.bf16.mxu0 0
    %134 = vmatpush1.bf16.msra.mxu0 %v117
    %135 = vmatprep.subr.bf16.mxu0 0
    %136 = vmatpush1.bf16.msra.mxu0 %v118
    %137 = vmatprep.subr.bf16.mxu0 0
    %138 = vmatpush1.bf16.msra.mxu0 %v119
    %139 = vmatprep.subr.bf16.mxu0 0
    %140 = vmatpush1.bf16.msra.mxu0 %v120
    %141 = vmatprep.subr.bf16.mxu0 0
    %142 = vmatpush1.bf16.msra.mxu0 %v121
    %143 = vmatprep.subr.bf16.mxu0 0
    %144 = vmatpush1.bf16.msra.mxu0 %v122
    %145 = vmatprep.subr.bf16.mxu0 0
    %146 = vmatpush1.bf16.msra.mxu0 %v123
    %147 = vmatprep.subr.bf16.mxu0 0
    %148 = vmatpush1.bf16.msra.mxu0 %v124
    %149 = vmatprep.subr.bf16.mxu0 0
    %150 = vmatpush1.bf16.msra.mxu0 0
    %151 = vmatprep.subr.bf16.mxu0 0
    %152 = vmatpush1.bf16.msra.mxu0 0
    %153 = vmatprep.subr.bf16.mxu0 0
    %154 = vmatpush1.bf16.msra.mxu0 0
    %155 = vmatprep.subr.bf16.mxu0 0
    %156 = vmatpush1.bf16.msra.mxu0 0
    %157 = vmatprep.subr.bf16.mxu0 0
    %158 = vmatpush1.bf16.msra.mxu0 0
    %159 = vmatprep.subr.bf16.mxu0 0
    %160 = vmatpush1.bf16.msra.mxu0 0
    %161 = vmatprep.subr.bf16.mxu0 0
    %162 = vmatpush1.bf16.msra.mxu0 0
    %163 = vmatprep.subr.bf16.mxu0 0
    %164 = vmatpush1.bf16.msra.mxu0 0
    %165 = vmatprep.mubr.bf16.mxu0 0
    %166 = vmatmul.mubr.bf16.gmra.mrb[0].mxu0 %v68
    %v167 = vpop.f32.mrb[0].mxu0
    %v168 = vadd.f32 0.0, %v167
    %v169 = vpop.f32.mrb[0].mxu0
    %v170 = vpop.f32.mrb[0].mxu0
    %v171 = vpop.f32.mrb[0].mxu0
    %172 = vdwg.mxu0
    %v173 = vadd.f32 %v67, %v168
    %v174 = vtanh.pop %v173
    %175 = vst [vmem:[#allocation2] sm:$0xff] %v174
    %s176 = scalar_lea.vmem [#allocation2], 8
    %v177 = vld [vmem:[%s176] sm:$0xff]
    %v178 = vpack.c.bf16 %v174, %v174
    %v179 = vpack.c.bf16 %v177, %v177
    %v180 = vld [vmem:[#allocation8] sm:$0xf]
    %v181 = vld [vmem:[#allocation8 + $0x4] sm:$0xf]
    %v182 = vld [vmem:[#allocation8 + $0x8] sm:$0xf]
    %v183 = vld [vmem:[#allocation8 + $0xc] sm:$0xf]
    %v184 = vld [vmem:[#allocation8 + $0x10] sm:$0xf]
    %v185 = vld [vmem:[#allocation8 + $0x14] sm:$0xf]
    %v186 = vld [vmem:[#allocation8 + $0x18] sm:$0xf]
    %v187 = vld [vmem:[#allocation8 + $0x1c] sm:$0xf]
    %v188 = vld [vmem:[#allocation8 + $0x20] sm:$0xf]
    %v189 = vld [vmem:[#allocation8 + $0x24] sm:$0xf]
    %v190 = vld [vmem:[#allocation8 + $0x28] sm:$0xf]
    %v191 = vld [vmem:[#allocation8 + $0x2c] sm:$0xf]
    %v192 = vld [vmem:[#allocation8 + $0x30] sm:$0xf]
    %v193 = vld [vmem:[#allocation8 + $0x34] sm:$0xf]
    %v194 = vld [vmem:[#allocation8 + $0x38] sm:$0xf]
    %v195 = vld [vmem:[#allocation8 + $0x3c] sm:$0xf]
    %v196 = vld [vmem:[#allocation8 + $0x40] sm:$0xf]
    %v197 = vld [vmem:[#allocation8 + $0x44] sm:$0xf]
    %v198 = vld [vmem:[#allocation8 + $0x48] sm:$0xf]
    %v199 = vld [vmem:[#allocation8 + $0x4c] sm:$0xf]
    %v200 = vld [vmem:[#allocation8 + $0x50] sm:$0xf]
    %v201 = vld [vmem:[#allocation8 + $0x54] sm:$0xf]
    %v202 = vld [vmem:[#allocation8 + $0x58] sm:$0xf]
    %v203 = vld [vmem:[#allocation8 + $0x5c] sm:$0xf]
    %v204 = vld [vmem:[#allocation8 + $0x60] sm:$0xf]
    %v205 = vld [vmem:[#allocation8 + $0x64] sm:$0xf]
    %v206 = vld [vmem:[#allocation8 + $0x68] sm:$0xf]
    %v207 = vld [vmem:[#allocation8 + $0x6c] sm:$0xf]
    %v208 = vld [vmem:[#allocation8 + $0x70] sm:$0xf]
    %v209 = vld [vmem:[#allocation8 + $0x74] sm:$0xf]
    %v210 = vld [vmem:[#allocation8 + $0x78] sm:$0xf]
    %v211 = vld [vmem:[#allocation8 + $0x7c] sm:$0xf]
    %v212 = vld [vmem:[%s3] sm:$0x1]
    %v214 = vlaneseq
    %v215 = vshrl.u32 %v214, 7
    %v216 = vsub.s32 0, %v215
    %v217 = vrot.slane %v212, %v216
    %v251 = vunpack.c.l.b16 %v180
    %v252 = vunpack.c.l.b16 %v181
    %v253 = vunpack.c.l.b16 %v182
    %v254 = vunpack.c.l.b16 %v183
    %v255 = vunpack.c.l.b16 %v184
    %v256 = vunpack.c.l.b16 %v185
    %v257 = vunpack.c.l.b16 %v186
    %v258 = vunpack.c.l.b16 %v187
    %v259 = vunpack.c.l.b16 %v188
    %v260 = vunpack.c.l.b16 %v189
    %v261 = vunpack.c.l.b16 %v190
    %v262 = vunpack.c.l.b16 %v191
    %v263 = vunpack.c.l.b16 %v192
    %v264 = vunpack.c.l.b16 %v193
    %v265 = vunpack.c.l.b16 %v194
    %v266 = vunpack.c.l.b16 %v195
    %v267 = vunpack.c.l.b16 %v196
    %v268 = vunpack.c.l.b16 %v197
    %v269 = vunpack.c.l.b16 %v198
    %v270 = vunpack.c.l.b16 %v199
    %v271 = vunpack.c.l.b16 %v200
    %v272 = vunpack.c.l.b16 %v201
    %v273 = vunpack.c.l.b16 %v202
    %v274 = vunpack.c.l.b16 %v203
    %v275 = vunpack.c.l.b16 %v204
    %v276 = vunpack.c.l.b16 %v205
    %v277 = vunpack.c.l.b16 %v206
    %v278 = vunpack.c.l.b16 %v207
    %v279 = vunpack.c.l.b16 %v208
    %v280 = vunpack.c.l.b16 %v209
    %v281 = vunpack.c.l.b16 %v210
    %v282 = vunpack.c.l.b16 %v211
    %v283 = vpack.c.b16 %v252, %v251
    %v284 = vpack.c.b16 %v254, %v253
    %v285 = vpack.c.b16 %v256, %v255
    %v286 = vpack.c.b16 %v258, %v257
    %v287 = vpack.c.b16 %v260, %v259
    %v288 = vpack.c.b16 %v262, %v261
    %v289 = vpack.c.b16 %v264, %v263
    %v290 = vpack.c.b16 %v266, %v265
    %v291 = vpack.c.b16 %v268, %v267
    %v292 = vpack.c.b16 %v270, %v269
    %v293 = vpack.c.b16 %v272, %v271
    %v294 = vpack.c.b16 %v274, %v273
    %v295 = vpack.c.b16 %v276, %v275
    %v296 = vpack.c.b16 %v278, %v277
    %v297 = vpack.c.b16 %v280, %v279
    %v298 = vpack.c.b16 %v282, %v281
    %315 = vmatprep.subr.bf16.mxu0 0
    %316 = vmatpush1.bf16.msra.mxu0 %v283
    %317 = vmatprep.subr.bf16.mxu0 0
    %318 = vmatpush1.bf16.msra.mxu0 %v284
    %319 = vmatprep.subr.bf16.mxu0 0
    %320 = vmatpush1.bf16.msra.mxu0 %v285
    %321 = vmatprep.subr.bf16.mxu0 0
    %322 = vmatpush1.bf16.msra.mxu0 %v286
    %323 = vmatprep.subr.bf16.mxu0 0
    %324 = vmatpush1.bf16.msra.mxu0 %v287
    %325 = vmatprep.subr.bf16.mxu0 0
    %326 = vmatpush1.bf16.msra.mxu0 %v288
    %327 = vmatprep.subr.bf16.mxu0 0
    %328 = vmatpush1.bf16.msra.mxu0 %v289
    %329 = vmatprep.subr.bf16.mxu0 0
    %330 = vmatpush1.bf16.msra.mxu0 %v290
    %331 = vmatprep.subr.bf16.mxu0 0
    %332 = vmatpush1.bf16.msra.mxu0 %v291
    %333 = vmatprep.subr.bf16.mxu0 0
    %334 = vmatpush1.bf16.msra.mxu0 %v292
    %335 = vmatprep.subr.bf16.mxu0 0
    %336 = vmatpush1.bf16.msra.mxu0 %v293
    %337 = vmatprep.subr.bf16.mxu0 0
    %338 = vmatpush1.bf16.msra.mxu0 %v294
    %339 = vmatprep.subr.bf16.mxu0 0
    %340 = vmatpush1.bf16.msra.mxu0 %v295
    %341 = vmatprep.subr.bf16.mxu0 0
    %342 = vmatpush1.bf16.msra.mxu0 %v296
    %343 = vmatprep.subr.bf16.mxu0 0
    %344 = vmatpush1.bf16.msra.mxu0 %v297
    %345 = vmatprep.subr.bf16.mxu0 0
    %346 = vmatpush1.bf16.msra.mxu0 %v298
    %347 = vmatprep.mubr.bf16.mxu0 %v179
    %348 = vmatmul.mubr.bf16.gmra.mrb[0].mxu0 %v178
    %v349 = vpop.f32.mrb[0].mxu0
    %v350 = vadd.f32 %v217, %v349
    %v351 = vpop.f32.mrb[0].mxu0
    %v352 = vpop.f32.mrb[0].mxu0
    %v353 = vpop.f32.mrb[0].mxu0
    %354 = vdwg.mxu0
    %v355 = vtanh.pop %v350
    %356 = vst [vmem:[%s176] sm:$0xff] %v355
    %357 = vst [vmem:[#allocation9] sm:$0xff] %v355
    %v358 = vld [vmem:[#allocation2] sm:$0xff]
    %s359 = scalar_lea.vmem [#allocation3], 8
    %v360 = vld [vmem:[%s359] sm:$0xff]
    %v361 = vpack.c.bf16 %v358, %v358
    %v362 = vld [vmem:[#allocation6] sm:$0xf]
    %v363 = vld [vmem:[#allocation6 + $0x4] sm:$0xf]
    %v364 = vld [vmem:[#allocation6 + $0x8] sm:$0xf]
    %v365 = vld [vmem:[#allocation6 + $0xc] sm:$0xf]
    %v366 = vld [vmem:[#allocation6 + $0x10] sm:$0xf]
    %v367 = vld [vmem:[#allocation6 + $0x14] sm:$0xf]
    %v368 = vld [vmem:[#allocation6 + $0x18] sm:$0xf]
    %v369 = vld [vmem:[#allocation6 + $0x1c] sm:$0xf]
    %v370 = vld [vmem:[#allocation6 + $0x20] sm:$0xf]
    %v371 = vld [vmem:[#allocation6 + $0x24] sm:$0xf]
    %v372 = vld [vmem:[#allocation6 + $0x28] sm:$0xf]
    %v373 = vld [vmem:[#allocation6 + $0x2c] sm:$0xf]
    %v374 = vld [vmem:[#allocation6 + $0x30] sm:$0xf]
    %v375 = vld [vmem:[#allocation6 + $0x34] sm:$0xf]
    %v376 = vld [vmem:[#allocation6 + $0x38] sm:$0xf]
    %v377 = vld [vmem:[#allocation6 + $0x3c] sm:$0xf]
    %v394 = vunpack.c.l.b16 %v362
    %v395 = vunpack.c.l.b16 %v363
    %v396 = vunpack.c.l.b16 %v364
    %v397 = vunpack.c.l.b16 %v365
    %v398 = vunpack.c.l.b16 %v366
    %v399 = vunpack.c.l.b16 %v367
    %v400 = vunpack.c.l.b16 %v368
    %v401 = vunpack.c.l.b16 %v369
    %v402 = vunpack.c.l.b16 %v370
    %v403 = vunpack.c.l.b16 %v371
    %v404 = vunpack.c.l.b16 %v372
    %v405 = vunpack.c.l.b16 %v373
    %v406 = vunpack.c.l.b16 %v374
    %v407 = vunpack.c.l.b16 %v375
    %v408 = vunpack.c.l.b16 %v376
    %v409 = vunpack.c.l.b16 %v377
    %v410 = vpack.c.b16 %v395, %v394
    %v411 = vpack.c.b16 %v397, %v396
    %v412 = vpack.c.b16 %v399, %v398
    %v413 = vpack.c.b16 %v401, %v400
    %v414 = vpack.c.b16 %v403, %v402
    %v415 = vpack.c.b16 %v405, %v404
    %v416 = vpack.c.b16 %v407, %v406
    %v417 = vpack.c.b16 %v409, %v408
    %426 = vmatprep.subr.bf16.mxu0 0
    %427 = vmatpush1.bf16.msra.mxu0 %v410
    %428 = vmatprep.subr.bf16.mxu0 0
    %429 = vmatpush1.bf16.msra.mxu0 %v411
    %430 = vmatprep.subr.bf16.mxu0 0
    %431 = vmatpush1.bf16.msra.mxu0 %v412
    %432 = vmatprep.subr.bf16.mxu0 0
    %433 = vmatpush1.bf16.msra.mxu0 %v413
    %434 = vmatprep.subr.bf16.mxu0 0
    %435 = vmatpush1.bf16.msra.mxu0 %v414
    %436 = vmatprep.subr.bf16.mxu0 0
    %437 = vmatpush1.bf16.msra.mxu0 %v415
    %438 = vmatprep.subr.bf16.mxu0 0
    %439 = vmatpush1.bf16.msra.mxu0 %v416
    %440 = vmatprep.subr.bf16.mxu0 0
    %441 = vmatpush1.bf16.msra.mxu0 %v417
    %442 = vmatprep.subr.bf16.mxu0 0
    %443 = vmatpush1.bf16.msra.mxu0 0
    %444 = vmatprep.subr.bf16.mxu0 0
    %445 = vmatpush1.bf16.msra.mxu0 0
    %446 = vmatprep.subr.bf16.mxu0 0
    %447 = vmatpush1.bf16.msra.mxu0 0
    %448 = vmatprep.subr.bf16.mxu0 0
    %449 = vmatpush1.bf16.msra.mxu0 0
    %450 = vmatprep.subr.bf16.mxu0 0
    %451 = vmatpush1.bf16.msra.mxu0 0
    %452 = vmatprep.subr.bf16.mxu0 0
    %453 = vmatpush1.bf16.msra.mxu0 0
    %454 = vmatprep.subr.bf16.mxu0 0
    %455 = vmatpush1.bf16.msra.mxu0 0
    %456 = vmatprep.subr.bf16.mxu0 0
    %457 = vmatpush1.bf16.msra.mxu0 0
    %458 = vmatprep.mubr.bf16.mxu0 0
    %459 = vmatmul.mubr.bf16.gmra.mrb[0].mxu0 %v361
    %v460 = vpop.f32.mrb[0].mxu0
    %v461 = vadd.f32 0.0, %v460
    %v462 = vpop.f32.mrb[0].mxu0
    %v463 = vpop.f32.mrb[0].mxu0
    %v464 = vpop.f32.mrb[0].mxu0
    %465 = vdwg.mxu0
    %v466 = vadd.f32 %v360, %v461
    %v467 = vtanh.pop %v466
    %468 = vst [vmem:[#allocation2] sm:$0xff] %v467
    %v469 = vld [vmem:[%s176] sm:$0xff]
    %v470 = vpack.c.bf16 %v467, %v467
    %v471 = vpack.c.bf16 %v469, %v469
    %v472 = vld [vmem:[#allocation8] sm:$0xf]
    %v473 = vld [vmem:[#allocation8 + $0x4] sm:$0xf]
    %v474 = vld [vmem:[#allocation8 + $0x8] sm:$0xf]
    %v475 = vld [vmem:[#allocation8 + $0xc] sm:$0xf]
    %v476 = vld [vmem:[#allocation8 + $0x10] sm:$0xf]
    %v477 = vld [vmem:[#allocation8 + $0x14] sm:$0xf]
    %v478 = vld [vmem:[#allocation8 + $0x18] sm:$0xf]
    %v479 = vld [vmem:[#allocation8 + $0x1c] sm:$0xf]
    %v480 = vld [vmem:[#allocation8 + $0x20] sm:$0xf]
    %v481 = vld [vmem:[#allocation8 + $0x24] sm:$0xf]
    %v482 = vld [vmem:[#allocation8 + $0x28] sm:$0xf]
    %v483 = vld [vmem:[#allocation8 + $0x2c] sm:$0xf]
    %v484 = vld [vmem:[#allocation8 + $0x30] sm:$0xf]
    %v485 = vld [vmem:[#allocation8 + $0x34] sm:$0xf]
    %v486 = vld [vmem:[#allocation8 + $0x38] sm:$0xf]
    %v487 = vld [vmem:[#allocation8 + $0x3c] sm:$0xf]
    %v488 = vld [vmem:[#allocation8 + $0x40] sm:$0xf]
    %v489 = vld [vmem:[#allocation8 + $0x44] sm:$0xf]
    %v490 = vld [vmem:[#allocation8 + $0x48] sm:$0xf]
    %v491 = vld [vmem:[#allocation8 + $0x4c] sm:$0xf]
    %v492 = vld [vmem:[#allocation8 + $0x50] sm:$0xf]
    %v493 = vld [vmem:[#allocation8 + $0x54] sm:$0xf]
    %v494 = vld [vmem:[#allocation8 + $0x58] sm:$0xf]
    %v495 = vld [vmem:[#allocation8 + $0x5c] sm:$0xf]
    %v496 = vld [vmem:[#allocation8 + $0x60] sm:$0xf]
    %v497 = vld [vmem:[#allocation8 + $0x64] sm:$0xf]
    %v498 = vld [vmem:[#allocation8 + $0x68] sm:$0xf]
    %v499 = vld [vmem:[#allocation8 + $0x6c] sm:$0xf]
    %v500 = vld [vmem:[#allocation8 + $0x70] sm:$0xf]
    %v501 = vld [vmem:[#allocation8 + $0x74] sm:$0xf]
    %v502 = vld [vmem:[#allocation8 + $0x78] sm:$0xf]
    %v503 = vld [vmem:[#allocation8 + $0x7c] sm:$0xf]
    %v504 = vld [vmem:[%s3] sm:$0x1]
    %v506 = vlaneseq
    %v507 = vshrl.u32 %v506, 7
    %v508 = vsub.s32 0, %v507
    %v509 = vrot.slane %v504, %v508
    %v543 = vunpack.c.l.b16 %v472
    %v544 = vunpack.c.l.b16 %v473
    %v545 = vunpack.c.l.b16 %v474
    %v546 = vunpack.c.l.b16 %v475
    %v547 = vunpack.c.l.b16 %v476
    %v548 = vunpack.c.l.b16 %v477
    %v549 = vunpack.c.l.b16 %v478
    %v550 = vunpack.c.l.b16 %v479
    %v551 = vunpack.c.l.b16 %v480
    %v552 = vunpack.c.l.b16 %v481
    %v553 = vunpack.c.l.b16 %v482
    %v554 = vunpack.c.l.b16 %v483
    %v555 = vunpack.c.l.b16 %v484
    %v556 = vunpack.c.l.b16 %v485
    %v557 = vunpack.c.l.b16 %v486
    %v558 = vunpack.c.l.b16 %v487
    %v559 = vunpack.c.l.b16 %v488
    %v560 = vunpack.c.l.b16 %v489
    %v561 = vunpack.c.l.b16 %v490
    %v562 = vunpack.c.l.b16 %v491
    %v563 = vunpack.c.l.b16 %v492
    %v564 = vunpack.c.l.b16 %v493
    %v565 = vunpack.c.l.b16 %v494
    %v566 = vunpack.c.l.b16 %v495
    %v567 = vunpack.c.l.b16 %v496
    %v568 = vunpack.c.l.b16 %v497
    %v569 = vunpack.c.l.b16 %v498
    %v570 = vunpack.c.l.b16 %v499
    %v571 = vunpack.c.l.b16 %v500
    %v572 = vunpack.c.l.b16 %v501
    %v573 = vunpack.c.l.b16 %v502
    %v574 = vunpack.c.l.b16 %v503
    %v575 = vpack.c.b16 %v544, %v543
    %v576 = vpack.c.b16 %v546, %v545
    %v577 = vpack.c.b16 %v548, %v547
    %v578 = vpack.c.b16 %v550, %v549
    %v579 = vpack.c.b16 %v552, %v551
    %v580 = vpack.c.b16 %v554, %v553
    %v581 = vpack.c.b16 %v556, %v555
    %v582 = vpack.c.b16 %v558, %v557
    %v583 = vpack.c.b16 %v560, %v559
    %v584 = vpack.c.b16 %v562, %v561
    %v585 = vpack.c.b16 %v564, %v563
    %v586 = vpack.c.b16 %v566, %v565
    %v587 = vpack.c.b16 %v568, %v567
    %v588 = vpack.c.b16 %v570, %v569
    %v589 = vpack.c.b16 %v572, %v571
    %v590 = vpack.c.b16 %v574, %v573
    %607 = vmatprep.subr.bf16.mxu0 0
    %608 = vmatpush1.bf16.msra.mxu0 %v575
    %609 = vmatprep.subr.bf16.mxu0 0
    %610 = vmatpush1.bf16.msra.mxu0 %v576
    %611 = vmatprep.subr.bf16.mxu0 0
    %612 = vmatpush1.bf16.msra.mxu0 %v577
    %613 = vmatprep.subr.bf16.mxu0 0
    %614 = vmatpush1.bf16.msra.mxu0 %v578
    %615 = vmatprep.subr.bf16.mxu0 0
    %616 = vmatpush1.bf16.msra.mxu0 %v579
    %617 = vmatprep.subr.bf16.mxu0 0
    %618 = vmatpush1.bf16.msra.mxu0 %v580
    %619 = vmatprep.subr.bf16.mxu0 0
    %620 = vmatpush1.bf16.msra.mxu0 %v581
    %621 = vmatprep.subr.bf16.mxu0 0
    %622 = vmatpush1.bf16.msra.mxu0 %v582
    %623 = vmatprep.subr.bf16.mxu0 0
    %624 = vmatpush1.bf16.msra.mxu0 %v583
    %625 = vmatprep.subr.bf16.mxu0 0
    %626 = vmatpush1.bf16.msra.mxu0 %v584
    %627 = vmatprep.subr.bf16.mxu0 0
    %628 = vmatpush1.bf16.msra.mxu0 %v585
    %629 = vmatprep.subr.bf16.mxu0 0
    %630 = vmatpush1.bf16.msra.mxu0 %v586
    %631 = vmatprep.subr.bf16.mxu0 0
    %632 = vmatpush1.bf16.msra.mxu0 %v587
    %633 = vmatprep.subr.bf16.mxu0 0
    %634 = vmatpush1.bf16.msra.mxu0 %v588
    %635 = vmatprep.subr.bf16.mxu0 0
    %636 = vmatpush1.bf16.msra.mxu0 %v589
    %637 = vmatprep.subr.bf16.mxu0 0
    %638 = vmatpush1.bf16.msra.mxu0 %v590
    %639 = vmatprep.mubr.bf16.mxu0 %v471
    %640 = vmatmul.mubr.bf16.gmra.mrb[0].mxu0 %v470
    %v641 = vpop.f32.mrb[0].mxu0
    %v642 = vadd.f32 %v509, %v641
    %v643 = vpop.f32.mrb[0].mxu0
    %v644 = vpop.f32.mrb[0].mxu0
    %v645 = vpop.f32.mrb[0].mxu0
    %646 = vdwg.mxu0
    %v647 = vtanh.pop %v642
    %648 = vst [vmem:[%s176] sm:$0xff] %v647
    %s649 = scalar_lea.vmem [#allocation9], 8
    %650 = vst [vmem:[%s649] sm:$0xff] %v647
    %v651 = vld [vmem:[#allocation2] sm:$0xff]
    %s652 = scalar_lea.vmem [#allocation3], 16
    %v653 = vld [vmem:[%s652] sm:$0xff]
    %v654 = vpack.c.bf16 %v651, %v651
    %v655 = vld [vmem:[#allocation6] sm:$0xf]
    %v656 = vld [vmem:[#allocation6 + $0x4] sm:$0xf]
    %v657 = vld [vmem:[#allocation6 + $0x8] sm:$0xf]
    %v658 = vld [vmem:[#allocation6 + $0xc] sm:$0xf]
    %v659 = vld [vmem:[#allocation6 + $0x10] sm:$0xf]
    %v660 = vld [vmem:[#allocation6 + $0x14] sm:$0xf]
    %v661 = vld [vmem:[#allocation6 + $0x18] sm:$0xf]
    %v662 = vld [vmem:[#allocation6 + $0x1c] sm:$0xf]
    %v663 = vld [vmem:[#allocation6 + $0x20] sm:$0xf]
    %v664 = vld [vmem:[#allocation6 + $0x24] sm:$0xf]
    %v665 = vld [vmem:[#allocation6 + $0x28] sm:$0xf]
    %v666 = vld [vmem:[#allocation6 + $0x2c] sm:$0xf]
    %v667 = vld [vmem:[#allocation6 + $0x30] sm:$0xf]
    %v668 = vld [vmem:[#allocation6 + $0x34] sm:$0xf]
    %v669 = vld [vmem:[#allocation6 + $0x38] sm:$0xf]
    %v670 = vld [vmem:[#allocation6 + $0x3c] sm:$0xf]
    %v687 = vunpack.c.l.b16 %v655
    %v688 = vunpack.c.l.b16 %v656
    %v689 = vunpack.c.l.b16 %v657
    %v690 = vunpack.c.l.b16 %v658
    %v691 = vunpack.c.l.b16 %v659
    %v692 = vunpack.c.l.b16 %v660
    %v693 = vunpack.c.l.b16 %v661
    %v694 = vunpack.c.l.b16 %v662
    %v695 = vunpack.c.l.b16 %v663
    %v696 = vunpack.c.l.b16 %v664
    %v697 = vunpack.c.l.b16 %v665
    %v698 = vunpack.c.l.b16 %v666
    %v699 = vunpack.c.l.b16 %v667
    %v700 = vunpack.c.l.b16 %v668
    %v701 = vunpack.c.l.b16 %v669
    %v702 = vunpack.c.l.b16 %v670
    %v703 = vpack.c.b16 %v688, %v687
    %v704 = vpack.c.b16 %v690, %v689
    %v705 = vpack.c.b16 %v692, %v691
    %v706 = vpack.c.b16 %v694, %v693
    %v707 = vpack.c.b16 %v696, %v695
    %v708 = vpack.c.b16 %v698, %v697
    %v709 = vpack.c.b16 %v700, %v699
    %v710 = vpack.c.b16 %v702, %v701
    %719 = vmatprep.subr.bf16.mxu0 0
    %720 = vmatpush1.bf16.msra.mxu0 %v703
    %721 = vmatprep.subr.bf16.mxu0 0
    %722 = vmatpush1.bf16.msra.mxu0 %v704
    %723 = vmatprep.subr.bf16.mxu0 0
    %724 = vmatpush1.bf16.msra.mxu0 %v705
    %725 = vmatprep.subr.bf16.mxu0 0
    %726 = vmatpush1.bf16.msra.mxu0 %v706
    %727 = vmatprep.subr.bf16.mxu0 0
    %728 = vmatpush1.bf16.msra.mxu0 %v707
    %729 = vmatprep.subr.bf16.mxu0 0
    %730 = vmatpush1.bf16.msra.mxu0 %v708
    %731 = vmatprep.subr.bf16.mxu0 0
    %732 = vmatpush1.bf16.msra.mxu0 %v709
    %733 = vmatprep.subr.bf16.mxu0 0
    %734 = vmatpush1.bf16.msra.mxu0 %v710
    %735 = vmatprep.subr.bf16.mxu0 0
    %736 = vmatpush1.bf16.msra.mxu0 0
    %737 = vmatprep.subr.bf16.mxu0 0
    %738 = vmatpush1.bf16.msra.mxu0 0
    %739 = vmatprep.subr.bf16.mxu0 0
    %740 = vmatpush1.bf16.msra.mxu0 0
    %741 = vmatprep.subr.bf16.mxu0 0
    %742 = vmatpush1.bf16.msra.mxu0 0
    %743 = vmatprep.subr.bf16.mxu0 0
    %744 = vmatpush1.bf16.msra.mxu0 0
    %745 = vmatprep.subr.bf16.mxu0 0
    %746 = vmatpush1.bf16.msra.mxu0 0
    %747 = vmatprep.subr.bf16.mxu0 0
    %748 = vmatpush1.bf16.msra.mxu0 0
    %749 = vmatprep.subr.bf16.mxu0 0
    %750 = vmatpush1.bf16.msra.mxu0 0
    %751 = vmatprep.mubr.bf16.mxu0 0
    %752 = vmatmul.mubr.bf16.gmra.mrb[0].mxu0 %v654
    %v753 = vpop.f32.mrb[0].mxu0
    %v754 = vadd.f32 0.0, %v753
    %v755 = vpop.f32.mrb[0].mxu0
    %v756 = vpop.f32.mrb[0].mxu0
    %v757 = vpop.f32.mrb[0].mxu0
    %758 = vdwg.mxu0
    %v759 = vadd.f32 %v653, %v754
    %v760 = vtanh.pop %v759
    %761 = vst [vmem:[#allocation2] sm:$0xff] %v760
    %v762 = vld [vmem:[%s176] sm:$0xff]
    %v763 = vpack.c.bf16 %v760, %v760
    %v764 = vpack.c.bf16 %v762, %v762
    %v765 = vld [vmem:[#allocation8] sm:$0xf]
    %v766 = vld [vmem:[#allocation8 + $0x4] sm:$0xf]
    %v767 = vld [vmem:[#allocation8 + $0x8] sm:$0xf]
    %v768 = vld [vmem:[#allocation8 + $0xc] sm:$0xf]
    %v769 = vld [vmem:[#allocation8 + $0x10] sm:$0xf]
    %v770 = vld [vmem:[#allocation8 + $0x14] sm:$0xf]
    %v771 = vld [vmem:[#allocation8 + $0x18] sm:$0xf]
    %v772 = vld [vmem:[#allocation8 + $0x1c] sm:$0xf]
    %v773 = vld [vmem:[#allocation8 + $0x20] sm:$0xf]
    %v774 = vld [vmem:[#allocation8 + $0x24] sm:$0xf]
    %v775 = vld [vmem:[#allocation8 + $0x28] sm:$0xf]
    %v776 = vld [vmem:[#allocation8 + $0x2c] sm:$0xf]
    %v777 = vld [vmem:[#allocation8 + $0x30] sm:$0xf]
    %v778 = vld [vmem:[#allocation8 + $0x34] sm:$0xf]
    %v779 = vld [vmem:[#allocation8 + $0x38] sm:$0xf]
    %v780 = vld [vmem:[#allocation8 + $0x3c] sm:$0xf]
    %v781 = vld [vmem:[#allocation8 + $0x40] sm:$0xf]
    %v782 = vld [vmem:[#allocation8 + $0x44] sm:$0xf]
    %v783 = vld [vmem:[#allocation8 + $0x48] sm:$0xf]
    %v784 = vld [vmem:[#allocation8 + $0x4c] sm:$0xf]
    %v785 = vld [vmem:[#allocation8 + $0x50] sm:$0xf]
    %v786 = vld [vmem:[#allocation8 + $0x54] sm:$0xf]
    %v787 = vld [vmem:[#allocation8 + $0x58] sm:$0xf]
    %v788 = vld [vmem:[#allocation8 + $0x5c] sm:$0xf]
    %v789 = vld [vmem:[#allocation8 + $0x60] sm:$0xf]
    %v790 = vld [vmem:[#allocation8 + $0x64] sm:$0xf]
    %v791 = vld [vmem:[#allocation8 + $0x68] sm:$0xf]
    %v792 = vld [vmem:[#allocation8 + $0x6c] sm:$0xf]
    %v793 = vld [vmem:[#allocation8 + $0x70] sm:$0xf]
    %v794 = vld [vmem:[#allocation8 + $0x74] sm:$0xf]
    %v795 = vld [vmem:[#allocation8 + $0x78] sm:$0xf]
    %v796 = vld [vmem:[#allocation8 + $0x7c] sm:$0xf]
    %v797 = vld [vmem:[%s3] sm:$0x1]
    %v799 = vlaneseq
    %v800 = vshrl.u32 %v799, 7
    %v801 = vsub.s32 0, %v800
    %v802 = vrot.slane %v797, %v801
    %v836 = vunpack.c.l.b16 %v765
    %v837 = vunpack.c.l.b16 %v766
    %v838 = vunpack.c.l.b16 %v767
    %v839 = vunpack.c.l.b16 %v768
    %v840 = vunpack.c.l.b16 %v769
    %v841 = vunpack.c.l.b16 %v770
    %v842 = vunpack.c.l.b16 %v771
    %v843 = vunpack.c.l.b16 %v772
    %v844 = vunpack.c.l.b16 %v773
    %v845 = vunpack.c.l.b16 %v774
    %v846 = vunpack.c.l.b16 %v775
    %v847 = vunpack.c.l.b16 %v776
    %v848 = vunpack.c.l.b16 %v777
    %v849 = vunpack.c.l.b16 %v778
    %v850 = vunpack.c.l.b16 %v779
    %v851 = vunpack.c.l.b16 %v780
    %v852 = vunpack.c.l.b16 %v781
    %v853 = vunpack.c.l.b16 %v782
    %v854 = vunpack.c.l.b16 %v783
    %v855 = vunpack.c.l.b16 %v784
    %v856 = vunpack.c.l.b16 %v785
    %v857 = vunpack.c.l.b16 %v786
    %v858 = vunpack.c.l.b16 %v787
    %v859 = vunpack.c.l.b16 %v788
    %v860 = vunpack.c.l.b16 %v789
    %v861 = vunpack.c.l.b16 %v790
    %v862 = vunpack.c.l.b16 %v791
    %v863 = vunpack.c.l.b16 %v792
    %v864 = vunpack.c.l.b16 %v793
    %v865 = vunpack.c.l.b16 %v794
    %v866 = vunpack.c.l.b16 %v795
    %v867 = vunpack.c.l.b16 %v796
    %v868 = vpack.c.b16 %v837, %v836
    %v869 = vpack.c.b16 %v839, %v838
    %v870 = vpack.c.b16 %v841, %v840
    %v871 = vpack.c.b16 %v843, %v842
    %v872 = vpack.c.b16 %v845, %v844
    %v873 = vpack.c.b16 %v847, %v846
    %v874 = vpack.c.b16 %v849, %v848
    %v875 = vpack.c.b16 %v851, %v850
    %v876 = vpack.c.b16 %v853, %v852
    %v877 = vpack.c.b16 %v855, %v854
    %v878 = vpack.c.b16 %v857, %v856
    %v879 = vpack.c.b16 %v859, %v858
    %v880 = vpack.c.b16 %v861, %v860
    %v881 = vpack.c.b16 %v863, %v862
    %v882 = vpack.c.b16 %v865, %v864
    %v883 = vpack.c.b16 %v867, %v866
    %900 = vmatprep.subr.bf16.mxu0 0
    %901 = vmatpush1.bf16.msra.mxu0 %v868
    %902 = vmatprep.subr.bf16.mxu0 0
    %903 = vmatpush1.bf16.msra.mxu0 %v869
    %904 = vmatprep.subr.bf16.mxu0 0
    %905 = vmatpush1.bf16.msra.mxu0 %v870
    %906 = vmatprep.subr.bf16.mxu0 0
    %907 = vmatpush1.bf16.msra.mxu0 %v871
    %908 = vmatprep.subr.bf16.mxu0 0
    %909 = vmatpush1.bf16.msra.mxu0 %v872
    %910 = vmatprep.subr.bf16.mxu0 0
    %911 = vmatpush1.bf16.msra.mxu0 %v873
    %912 = vmatprep.subr.bf16.mxu0 0
    %913 = vmatpush1.bf16.msra.mxu0 %v874
    %914 = vmatprep.subr.bf16.mxu0 0
    %915 = vmatpush1.bf16.msra.mxu0 %v875
    %916 = vmatprep.subr.bf16.mxu0 0
    %917 = vmatpush1.bf16.msra.mxu0 %v876
    %918 = vmatprep.subr.bf16.mxu0 0
    %919 = vmatpush1.bf16.msra.mxu0 %v877
    %920 = vmatprep.subr.bf16.mxu0 0
    %921 = vmatpush1.bf16.msra.mxu0 %v878
    %922 = vmatprep.subr.bf16.mxu0 0
    %923 = vmatpush1.bf16.msra.mxu0 %v879
    %924 = vmatprep.subr.bf16.mxu0 0
    %925 = vmatpush1.bf16.msra.mxu0 %v880
    %926 = vmatprep.subr.bf16.mxu0 0
    %927 = vmatpush1.bf16.msra.mxu0 %v881
    %928 = vmatprep.subr.bf16.mxu0 0
    %929 = vmatpush1.bf16.msra.mxu0 %v882
    %930 = vmatprep.subr.bf16.mxu0 0
    %931 = vmatpush1.bf16.msra.mxu0 %v883
    %932 = vmatprep.mubr.bf16.mxu0 %v764
    %933 = vmatmul.mubr.bf16.gmra.mrb[0].mxu0 %v763
    %v934 = vpop.f32.mrb[0].mxu0
    %v935 = vadd.f32 %v802, %v934
    %v936 = vpop.f32.mrb[0].mxu0
    %v937 = vpop.f32.mrb[0].mxu0
    %v938 = vpop.f32.mrb[0].mxu0
    %939 = vdwg.mxu0
    %v940 = vtanh.pop %v935
    %941 = vst [vmem:[%s176] sm:$0xff] %v940
    %s942 = scalar_lea.vmem [#allocation9], 16
    %943 = vst [vmem:[%s942] sm:$0xff] %v940
    %v944 = vld [vmem:[#allocation2] sm:$0xff]
    %s945 = scalar_lea.vmem [#allocation3], 24
    %v946 = vld [vmem:[%s945] sm:$0xff]
    %v947 = vpack.c.bf16 %v944, %v944
    %v948 = vld [vmem:[#allocation6] sm:$0xf]
    %v949 = vld [vmem:[#allocation6 + $0x4] sm:$0xf]
    %v950 = vld [vmem:[#allocation6 + $0x8] sm:$0xf]
    %v951 = vld [vmem:[#allocation6 + $0xc] sm:$0xf]
    %v952 = vld [vmem:[#allocation6 + $0x10] sm:$0xf]
    %v953 = vld [vmem:[#allocation6 + $0x14] sm:$0xf]
    %v954 = vld [vmem:[#allocation6 + $0x18] sm:$0xf]
    %v955 = vld [vmem:[#allocation6 + $0x1c] sm:$0xf]
    %v956 = vld [vmem:[#allocation6 + $0x20] sm:$0xf]
    %v957 = vld [vmem:[#allocation6 + $0x24] sm:$0xf]
    %v958 = vld [vmem:[#allocation6 + $0x28] sm:$0xf]
    %v959 = vld [vmem:[#allocation6 + $0x2c] sm:$0xf]
    %v960 = vld [vmem:[#allocation6 + $0x30] sm:$0xf]
    %v961 = vld [vmem:[#allocation6 + $0x34] sm:$0xf]
    %v962 = vld [vmem:[#allocation6 + $0x38] sm:$0xf]
    %v963 = vld [vmem:[#allocation6 + $0x3c] sm:$0xf]
    %v980 = vunpack.c.l.b16 %v948
    %v981 = vunpack.c.l.b16 %v949
    %v982 = vunpack.c.l.b16 %v950
    %v983 = vunpack.c.l.b16 %v951
    %v984 = vunpack.c.l.b16 %v952
    %v985 = vunpack.c.l.b16 %v953
    %v986 = vunpack.c.l.b16 %v954
    %v987 = vunpack.c.l.b16 %v955
    %v988 = vunpack.c.l.b16 %v956
    %v989 = vunpack.c.l.b16 %v957
    %v990 = vunpack.c.l.b16 %v958
    %v991 = vunpack.c.l.b16 %v959
    %v992 = vunpack.c.l.b16 %v960
    %v993 = vunpack.c.l.b16 %v961
    %v994 = vunpack.c.l.b16 %v962
    %v995 = vunpack.c.l.b16 %v963
    %v996 = vpack.c.b16 %v981, %v980
    %v997 = vpack.c.b16 %v983, %v982
    %v998 = vpack.c.b16 %v985, %v984
    %v999 = vpack.c.b16 %v987, %v986
    %v1000 = vpack.c.b16 %v989, %v988
    %v1001 = vpack.c.b16 %v991, %v990
    %v1002 = vpack.c.b16 %v993, %v992
    %v1003 = vpack.c.b16 %v995, %v994
    %1012 = vmatprep.subr.bf16.mxu0 0
    %1013 = vmatpush1.bf16.msra.mxu0 %v996
    %1014 = vmatprep.subr.bf16.mxu0 0
    %1015 = vmatpush1.bf16.msra.mxu0 %v997
    %1016 = vmatprep.subr.bf16.mxu0 0
    %1017 = vmatpush1.bf16.msra.mxu0 %v998
    %1018 = vmatprep.subr.bf16.mxu0 0
    %1019 = vmatpush1.bf16.msra.mxu0 %v999
    %1020 = vmatprep.subr.bf16.mxu0 0
    %1021 = vmatpush1.bf16.msra.mxu0 %v1000
    %1022 = vmatprep.subr.bf16.mxu0 0
    %1023 = vmatpush1.bf16.msra.mxu0 %v1001
    %1024 = vmatprep.subr.bf16.mxu0 0
    %1025 = vmatpush1.bf16.msra.mxu0 %v1002
    %1026 = vmatprep.subr.bf16.mxu0 0
    %1027 = vmatpush1.bf16.msra.mxu0 %v1003
    %1028 = vmatprep.subr.bf16.mxu0 0
    %1029 = vmatpush1.bf16.msra.mxu0 0
    %1030 = vmatprep.subr.bf16.mxu0 0
    %1031 = vmatpush1.bf16.msra.mxu0 0
    %1032 = vmatprep.subr.bf16.mxu0 0
    %1033 = vmatpush1.bf16.msra.mxu0 0
    %1034 = vmatprep.subr.bf16.mxu0 0
    %1035 = vmatpush1.bf16.msra.mxu0 0
    %1036 = vmatprep.subr.bf16.mxu0 0
    %1037 = vmatpush1.bf16.msra.mxu0 0
    %1038 = vmatprep.subr.bf16.mxu0 0
    %1039 = vmatpush1.bf16.msra.mxu0 0
    %1040 = vmatprep.subr.bf16.mxu0 0
    %1041 = vmatpush1.bf16.msra.mxu0 0
    %1042 = vmatprep.subr.bf16.mxu0 0
    %1043 = vmatpush1.bf16.msra.mxu0 0
    %1044 = vmatprep.mubr.bf16.mxu0 0
    %1045 = vmatmul.mubr.bf16.gmra.mrb[0].mxu0 %v947
    %v1046 = vpop.f32.mrb[0].mxu0
    %v1047 = vadd.f32 0.0, %v1046
    %v1048 = vpop.f32.mrb[0].mxu0
    %v1049 = vpop.f32.mrb[0].mxu0
    %v1050 = vpop.f32.mrb[0].mxu0
    %1051 = vdwg.mxu0
    %v1052 = vadd.f32 %v946, %v1047
    %v1053 = vtanh.pop %v1052
    %1054 = vst [vmem:[#allocation2] sm:$0xff] %v1053
    %v1055 = vld [vmem:[%s176] sm:$0xff]
    %v1056 = vpack.c.bf16 %v1053, %v1053
    %v1057 = vpack.c.bf16 %v1055, %v1055
    %v1058 = vld [vmem:[#allocation8] sm:$0xf]
    %v1059 = vld [vmem:[#allocation8 + $0x4] sm:$0xf]
    %v1060 = vld [vmem:[#allocation8 + $0x8] sm:$0xf]
    %v1061 = vld [vmem:[#allocation8 + $0xc] sm:$0xf]
    %v1062 = vld [vmem:[#allocation8 + $0x10] sm:$0xf]
    %v1063 = vld [vmem:[#allocation8 + $0x14] sm:$0xf]
    %v1064 = vld [vmem:[#allocation8 + $0x18] sm:$0xf]
    %v1065 = vld [vmem:[#allocation8 + $0x1c] sm:$0xf]
    %v1066 = vld [vmem:[#allocation8 + $0x20] sm:$0xf]
    %v1067 = vld [vmem:[#allocation8 + $0x24] sm:$0xf]
    %v1068 = vld [vmem:[#allocation8 + $0x28] sm:$0xf]
    %v1069 = vld [vmem:[#allocation8 + $0x2c] sm:$0xf]
    %v1070 = vld [vmem:[#allocation8 + $0x30] sm:$0xf]
    %v1071 = vld [vmem:[#allocation8 + $0x34] sm:$0xf]
    %v1072 = vld [vmem:[#allocation8 + $0x38] sm:$0xf]
    %v1073 = vld [vmem:[#allocation8 + $0x3c] sm:$0xf]
    %v1074 = vld [vmem:[#allocation8 + $0x40] sm:$0xf]
    %v1075 = vld [vmem:[#allocation8 + $0x44] sm:$0xf]
    %v1076 = vld [vmem:[#allocation8 + $0x48] sm:$0xf]
    %v1077 = vld [vmem:[#allocation8 + $0x4c] sm:$0xf]
    %v1078 = vld [vmem:[#allocation8 + $0x50] sm:$0xf]
    %v1079 = vld [vmem:[#allocation8 + $0x54] sm:$0xf]
    %v1080 = vld [vmem:[#allocation8 + $0x58] sm:$0xf]
    %v1081 = vld [vmem:[#allocation8 + $0x5c] sm:$0xf]
    %v1082 = vld [vmem:[#allocation8 + $0x60] sm:$0xf]
    %v1083 = vld [vmem:[#allocation8 + $0x64] sm:$0xf]
    %v1084 = vld [vmem:[#allocation8 + $0x68] sm:$0xf]
    %v1085 = vld [vmem:[#allocation8 + $0x6c] sm:$0xf]
    %v1086 = vld [vmem:[#allocation8 + $0x70] sm:$0xf]
    %v1087 = vld [vmem:[#allocation8 + $0x74] sm:$0xf]
    %v1088 = vld [vmem:[#allocation8 + $0x78] sm:$0xf]
    %v1089 = vld [vmem:[#allocation8 + $0x7c] sm:$0xf]
    %v1090 = vld [vmem:[%s3] sm:$0x1]
    %v1092 = vlaneseq
    %v1093 = vshrl.u32 %v1092, 7
    %v1094 = vsub.s32 0, %v1093
    %v1095 = vrot.slane %v1090, %v1094
    %v1129 = vunpack.c.l.b16 %v1058
    %v1130 = vunpack.c.l.b16 %v1059
    %v1131 = vunpack.c.l.b16 %v1060
    %v1132 = vunpack.c.l.b16 %v1061
    %v1133 = vunpack.c.l.b16 %v1062
    %v1134 = vunpack.c.l.b16 %v1063
    %v1135 = vunpack.c.l.b16 %v1064
    %v1136 = vunpack.c.l.b16 %v1065
    %v1137 = vunpack.c.l.b16 %v1066
    %v1138 = vunpack.c.l.b16 %v1067
    %v1139 = vunpack.c.l.b16 %v1068
    %v1140 = vunpack.c.l.b16 %v1069
    %v1141 = vunpack.c.l.b16 %v1070
    %v1142 = vunpack.c.l.b16 %v1071
    %v1143 = vunpack.c.l.b16 %v1072
    %v1144 = vunpack.c.l.b16 %v1073
    %v1145 = vunpack.c.l.b16 %v1074
    %v1146 = vunpack.c.l.b16 %v1075
    %v1147 = vunpack.c.l.b16 %v1076
    %v1148 = vunpack.c.l.b16 %v1077
    %v1149 = vunpack.c.l.b16 %v1078
    %v1150 = vunpack.c.l.b16 %v1079
    %v1151 = vunpack.c.l.b16 %v1080
    %v1152 = vunpack.c.l.b16 %v1081
    %v1153 = vunpack.c.l.b16 %v1082
    %v1154 = vunpack.c.l.b16 %v1083
    %v1155 = vunpack.c.l.b16 %v1084
    %v1156 = vunpack.c.l.b16 %v1085
    %v1157 = vunpack.c.l.b16 %v1086
    %v1158 = vunpack.c.l.b16 %v1087
    %v1159 = vunpack.c.l.b16 %v1088
    %v1160 = vunpack.c.l.b16 %v1089
    %v1161 = vpack.c.b16 %v1130, %v1129
    %v1162 = vpack.c.b16 %v1132, %v1131
    %v1163 = vpack.c.b16 %v1134, %v1133
    %v1164 = vpack.c.b16 %v1136, %v1135
    %v1165 = vpack.c.b16 %v1138, %v1137
    %v1166 = vpack.c.b16 %v1140, %v1139
    %v1167 = vpack.c.b16 %v1142, %v1141
    %v1168 = vpack.c.b16 %v1144, %v1143
    %v1169 = vpack.c.b16 %v1146, %v1145
    %v1170 = vpack.c.b16 %v1148, %v1147
    %v1171 = vpack.c.b16 %v1150, %v1149
    %v1172 = vpack.c.b16 %v1152, %v1151
    %v1173 = vpack.c.b16 %v1154, %v1153
    %v1174 = vpack.c.b16 %v1156, %v1155
    %v1175 = vpack.c.b16 %v1158, %v1157
    %v1176 = vpack.c.b16 %v1160, %v1159
    %1193 = vmatprep.subr.bf16.mxu0 0
    %1194 = vmatpush1.bf16.msra.mxu0 %v1161
    %1195 = vmatprep.subr.bf16.mxu0 0
    %1196 = vmatpush1.bf16.msra.mxu0 %v1162
    %1197 = vmatprep.subr.bf16.mxu0 0
    %1198 = vmatpush1.bf16.msra.mxu0 %v1163
    %1199 = vmatprep.subr.bf16.mxu0 0
    %1200 = vmatpush1.bf16.msra.mxu0 %v1164
    %1201 = vmatprep.subr.bf16.mxu0 0
    %1202 = vmatpush1.bf16.msra.mxu0 %v1165
    %1203 = vmatprep.subr.bf16.mxu0 0
    %1204 = vmatpush1.bf16.msra.mxu0 %v1166
    %1205 = vmatprep.subr.bf16.mxu0 0
    %1206 = vmatpush1.bf16.msra.mxu0 %v1167
    %1207 = vmatprep.subr.bf16.mxu0 0
    %1208 = vmatpush1.bf16.msra.mxu0 %v1168
    %1209 = vmatprep.subr.bf16.mxu0 0
    %1210 = vmatpush1.bf16.msra.mxu0 %v1169
    %1211 = vmatprep.subr.bf16.mxu0 0
    %1212 = vmatpush1.bf16.msra.mxu0 %v1170
    %1213 = vmatprep.subr.bf16.mxu0 0
    %1214 = vmatpush1.bf16.msra.mxu0 %v1171
    %1215 = vmatprep.subr.bf16.mxu0 0
    %1216 = vmatpush1.bf16.msra.mxu0 %v1172
    %1217 = vmatprep.subr.bf16.mxu0 0
    %1218 = vmatpush1.bf16.msra.mxu0 %v1173
    %1219 = vmatprep.subr.bf16.mxu0 0
    %1220 = vmatpush1.bf16.msra.mxu0 %v1174
    %1221 = vmatprep.subr.bf16.mxu0 0
    %1222 = vmatpush1.bf16.msra.mxu0 %v1175
    %1223 = vmatprep.subr.bf16.mxu0 0
    %1224 = vmatpush1.bf16.msra.mxu0 %v1176
    %1225 = vmatprep.mubr.bf16.mxu0 %v1057
    %1226 = vmatmul.mubr.bf16.gmra.mrb[0].mxu0 %v1056
    %v1227 = vpop.f32.mrb[0].mxu0
    %v1228 = vadd.f32 %v1095, %v1227
    %v1229 = vpop.f32.mrb[0].mxu0
    %v1230 = vpop.f32.mrb[0].mxu0
    %v1231 = vpop.f32.mrb[0].mxu0
    %1232 = vdwg.mxu0
    %v1233 = vtanh.pop %v1228
    %1234 = vst [vmem:[%s176] sm:$0xff] %v1233
    %s1235 = scalar_lea.vmem [#allocation9], 24
    %1236 = vst [vmem:[%s1235] sm:$0xff] %v1233
    %v1237 = vld [vmem:[#allocation2] sm:$0xff]
    %s1238 = scalar_lea.vmem [#allocation3], 32
    %v1239 = vld [vmem:[%s1238] sm:$0xff]
    %v1240 = vpack.c.bf16 %v1237, %v1237
    %v1241 = vld [vmem:[#allocation6] sm:$0xf]
    %v1242 = vld [vmem:[#allocation6 + $0x4] sm:$0xf]
    %v1243 = vld [vmem:[#allocation6 + $0x8] sm:$0xf]
    %v1244 = vld [vmem:[#allocation6 + $0xc] sm:$0xf]
    %v1245 = vld [vmem:[#allocation6 + $0x10] sm:$0xf]
    %v1246 = vld [vmem:[#allocation6 + $0x14] sm:$0xf]
    %v1247 = vld [vmem:[#allocation6 + $0x18] sm:$0xf]
    %v1248 = vld [vmem:[#allocation6 + $0x1c] sm:$0xf]
    %v1249 = vld [vmem:[#allocation6 + $0x20] sm:$0xf]
    %v1250 = vld [vmem:[#allocation6 + $0x24] sm:$0xf]
    %v1251 = vld [vmem:[#allocation6 + $0x28] sm:$0xf]
    %v1252 = vld [vmem:[#allocation6 + $0x2c] sm:$0xf]
    %v1253 = vld [vmem:[#allocation6 + $0x30] sm:$0xf]
    %v1254 = vld [vmem:[#allocation6 + $0x34] sm:$0xf]
    %v1255 = vld [vmem:[#allocation6 + $0x38] sm:$0xf]
    %v1256 = vld [vmem:[#allocation6 + $0x3c] sm:$0xf]
    %v1273 = vunpack.c.l.b16 %v1241
    %v1274 = vunpack.c.l.b16 %v1242
    %v1275 = vunpack.c.l.b16 %v1243
    %v1276 = vunpack.c.l.b16 %v1244
    %v1277 = vunpack.c.l.b16 %v1245
    %v1278 = vunpack.c.l.b16 %v1246
    %v1279 = vunpack.c.l.b16 %v1247
    %v1280 = vunpack.c.l.b16 %v1248
    %v1281 = vunpack.c.l.b16 %v1249
    %v1282 = vunpack.c.l.b16 %v1250
    %v1283 = vunpack.c.l.b16 %v1251
    %v1284 = vunpack.c.l.b16 %v1252
    %v1285 = vunpack.c.l.b16 %v1253
    %v1286 = vunpack.c.l.b16 %v1254
    %v1287 = vunpack.c.l.b16 %v1255
    %v1288 = vunpack.c.l.b16 %v1256
    %v1289 = vpack.c.b16 %v1274, %v1273
    %v1290 = vpack.c.b16 %v1276, %v1275
    %v1291 = vpack.c.b16 %v1278, %v1277
    %v1292 = vpack.c.b16 %v1280, %v1279
    %v1293 = vpack.c.b16 %v1282, %v1281
    %v1294 = vpack.c.b16 %v1284, %v1283
    %v1295 = vpack.c.b16 %v1286, %v1285
    %v1296 = vpack.c.b16 %v1288, %v1287
    %1305 = vmatprep.subr.bf16.mxu0 0
    %1306 = vmatpush1.bf16.msra.mxu0 %v1289
    %1307 = vmatprep.subr.bf16.mxu0 0
    %1308 = vmatpush1.bf16.msra.mxu0 %v1290
    %1309 = vmatprep.subr.bf16.mxu0 0
    %1310 = vmatpush1.bf16.msra.mxu0 %v1291
    %1311 = vmatprep.subr.bf16.mxu0 0
    %1312 = vmatpush1.bf16.msra.mxu0 %v1292
    %1313 = vmatprep.subr.bf16.mxu0 0
    %1314 = vmatpush1.bf16.msra.mxu0 %v1293
    %1315 = vmatprep.subr.bf16.mxu0 0
    %1316 = vmatpush1.bf16.msra.mxu0 %v1294
    %1317 = vmatprep.subr.bf16.mxu0 0
    %1318 = vmatpush1.bf16.msra.mxu0 %v1295
    %1319 = vmatprep.subr.bf16.mxu0 0
    %1320 = vmatpush1.bf16.msra.mxu0 %v1296
    %1321 = vmatprep.subr.bf16.mxu0 0
    %1322 = vmatpush1.bf16.msra.mxu0 0
    %1323 = vmatprep.subr.bf16.mxu0 0
    %1324 = vmatpush1.bf16.msra.mxu0 0
    %1325 = vmatprep.subr.bf16.mxu0 0
    %1326 = vmatpush1.bf16.msra.mxu0 0
    %1327 = vmatprep.subr.bf16.mxu0 0
    %1328 = vmatpush1.bf16.msra.mxu0 0
    %1329 = vmatprep.subr.bf16.mxu0 0
    %1330 = vmatpush1.bf16.msra.mxu0 0
    %1331 = vmatprep.subr.bf16.mxu0 0
    %1332 = vmatpush1.bf16.msra.mxu0 0
    %1333 = vmatprep.subr.bf16.mxu0 0
    %1334 = vmatpush1.bf16.msra.mxu0 0
    %1335 = vmatprep.subr.bf16.mxu0 0
    %1336 = vmatpush1.bf16.msra.mxu0 0
    %1337 = vmatprep.mubr.bf16.mxu0 0
    %1338 = vmatmul.mubr.bf16.gmra.mrb[0].mxu0 %v1240
    %v1339 = vpop.f32.mrb[0].mxu0
    %v1340 = vadd.f32 0.0, %v1339
    %v1341 = vpop.f32.mrb[0].mxu0
    %v1342 = vpop.f32.mrb[0].mxu0
    %v1343 = vpop.f32.mrb[0].mxu0
    %1344 = vdwg.mxu0
    %v1345 = vadd.f32 %v1239, %v1340
    %v1346 = vtanh.pop %v1345
    %1347 = vst [vmem:[#allocation2] sm:$0xff] %v1346
    %v1348 = vld [vmem:[%s176] sm:$0xff]
    %v1349 = vpack.c.bf16 %v1346, %v1346
    %v1350 = vpack.c.bf16 %v1348, %v1348
    %v1351 = vld [vmem:[#allocation8] sm:$0xf]
    %v1352 = vld [vmem:[#allocation8 + $0x4] sm:$0xf]
    %v1353 = vld [vmem:[#allocation8 + $0x8] sm:$0xf]
    %v1354 = vld [vmem:[#allocation8 + $0xc] sm:$0xf]
    %v1355 = vld [vmem:[#allocation8 + $0x10] sm:$0xf]
    %v1356 = vld [vmem:[#allocation8 + $0x14] sm:$0xf]
    %v1357 = vld [vmem:[#allocation8 + $0x18] sm:$0xf]
    %v1358 = vld [vmem:[#allocation8 + $0x1c] sm:$0xf]
    %v1359 = vld [vmem:[#allocation8 + $0x20] sm:$0xf]
    %v1360 = vld [vmem:[#allocation8 + $0x24] sm:$0xf]
    %v1361 = vld [vmem:[#allocation8 + $0x28] sm:$0xf]
    %v1362 = vld [vmem:[#allocation8 + $0x2c] sm:$0xf]
    %v1363 = vld [vmem:[#allocation8 + $0x30] sm:$0xf]
    %v1364 = vld [vmem:[#allocation8 + $0x34] sm:$0xf]
    %v1365 = vld [vmem:[#allocation8 + $0x38] sm:$0xf]
    %v1366 = vld [vmem:[#allocation8 + $0x3c] sm:$0xf]
    %v1367 = vld [vmem:[#allocation8 + $0x40] sm:$0xf]
    %v1368 = vld [vmem:[#allocation8 + $0x44] sm:$0xf]
    %v1369 = vld [vmem:[#allocation8 + $0x48] sm:$0xf]
    %v1370 = vld [vmem:[#allocation8 + $0x4c] sm:$0xf]
    %v1371 = vld [vmem:[#allocation8 + $0x50] sm:$0xf]
    %v1372 = vld [vmem:[#allocation8 + $0x54] sm:$0xf]
    %v1373 = vld [vmem:[#allocation8 + $0x58] sm:$0xf]
    %v1374 = vld [vmem:[#allocation8 + $0x5c] sm:$0xf]
    %v1375 = vld [vmem:[#allocation8 + $0x60] sm:$0xf]
    %v1376 = vld [vmem:[#allocation8 + $0x64] sm:$0xf]
    %v1377 = vld [vmem:[#allocation8 + $0x68] sm:$0xf]
    %v1378 = vld [vmem:[#allocation8 + $0x6c] sm:$0xf]
    %v1379 = vld [vmem:[#allocation8 + $0x70] sm:$0xf]
    %v1380 = vld [vmem:[#allocation8 + $0x74] sm:$0xf]
    %v1381 = vld [vmem:[#allocation8 + $0x78] sm:$0xf]
    %v1382 = vld [vmem:[#allocation8 + $0x7c] sm:$0xf]
    %v1383 = vld [vmem:[%s3] sm:$0x1]
    %v1385 = vlaneseq
    %v1386 = vshrl.u32 %v1385, 7
    %v1387 = vsub.s32 0, %v1386
    %v1388 = vrot.slane %v1383, %v1387
    %v1422 = vunpack.c.l.b16 %v1351
    %v1423 = vunpack.c.l.b16 %v1352
    %v1424 = vunpack.c.l.b16 %v1353
    %v1425 = vunpack.c.l.b16 %v1354
    %v1426 = vunpack.c.l.b16 %v1355
    %v1427 = vunpack.c.l.b16 %v1356
    %v1428 = vunpack.c.l.b16 %v1357
    %v1429 = vunpack.c.l.b16 %v1358
    %v1430 = vunpack.c.l.b16 %v1359
    %v1431 = vunpack.c.l.b16 %v1360
    %v1432 = vunpack.c.l.b16 %v1361
    %v1433 = vunpack.c.l.b16 %v1362
    %v1434 = vunpack.c.l.b16 %v1363
    %v1435 = vunpack.c.l.b16 %v1364
    %v1436 = vunpack.c.l.b16 %v1365
    %v1437 = vunpack.c.l.b16 %v1366
    %v1438 = vunpack.c.l.b16 %v1367
    %v1439 = vunpack.c.l.b16 %v1368
    %v1440 = vunpack.c.l.b16 %v1369
    %v1441 = vunpack.c.l.b16 %v1370
    %v1442 = vunpack.c.l.b16 %v1371
    %v1443 = vunpack.c.l.b16 %v1372
    %v1444 = vunpack.c.l.b16 %v1373
    %v1445 = vunpack.c.l.b16 %v1374
    %v1446 = vunpack.c.l.b16 %v1375
    %v1447 = vunpack.c.l.b16 %v1376
    %v1448 = vunpack.c.l.b16 %v1377
    %v1449 = vunpack.c.l.b16 %v1378
    %v1450 = vunpack.c.l.b16 %v1379
    %v1451 = vunpack.c.l.b16 %v1380
    %v1452 = vunpack.c.l.b16 %v1381
    %v1453 = vunpack.c.l.b16 %v1382
    %v1454 = vpack.c.b16 %v1423, %v1422
    %v1455 = vpack.c.b16 %v1425, %v1424
    %v1456 = vpack.c.b16 %v1427, %v1426
    %v1457 = vpack.c.b16 %v1429, %v1428
    %v1458 = vpack.c.b16 %v1431, %v1430
    %v1459 = vpack.c.b16 %v1433, %v1432
    %v1460 = vpack.c.b16 %v1435, %v1434
    %v1461 = vpack.c.b16 %v1437, %v1436
    %v1462 = vpack.c.b16 %v1439, %v1438
    %v1463 = vpack.c.b16 %v1441, %v1440
    %v1464 = vpack.c.b16 %v1443, %v1442
    %v1465 = vpack.c.b16 %v1445, %v1444
    %v1466 = vpack.c.b16 %v1447, %v1446
    %v1467 = vpack.c.b16 %v1449, %v1448
    %v1468 = vpack.c.b16 %v1451, %v1450
    %v1469 = vpack.c.b16 %v1453, %v1452
    %1486 = vmatprep.subr.bf16.mxu0 0
    %1487 = vmatpush1.bf16.msra.mxu0 %v1454
    %1488 = vmatprep.subr.bf16.mxu0 0
    %1489 = vmatpush1.bf16.msra.mxu0 %v1455
    %1490 = vmatprep.subr.bf16.mxu0 0
    %1491 = vmatpush1.bf16.msra.mxu0 %v1456
    %1492 = vmatprep.subr.bf16.mxu0 0
    %1493 = vmatpush1.bf16.msra.mxu0 %v1457
    %1494 = vmatprep.subr.bf16.mxu0 0
    %1495 = vmatpush1.bf16.msra.mxu0 %v1458
    %1496 = vmatprep.subr.bf16.mxu0 0
    %1497 = vmatpush1.bf16.msra.mxu0 %v1459
    %1498 = vmatprep.subr.bf16.mxu0 0
    %1499 = vmatpush1.bf16.msra.mxu0 %v1460
    %1500 = vmatprep.subr.bf16.mxu0 0
    %1501 = vmatpush1.bf16.msra.mxu0 %v1461
    %1502 = vmatprep.subr.bf16.mxu0 0
    %1503 = vmatpush1.bf16.msra.mxu0 %v1462
    %1504 = vmatprep.subr.bf16.mxu0 0
    %1505 = vmatpush1.bf16.msra.mxu0 %v1463
    %1506 = vmatprep.subr.bf16.mxu0 0
    %1507 = vmatpush1.bf16.msra.mxu0 %v1464
    %1508 = vmatprep.subr.bf16.mxu0 0
    %1509 = vmatpush1.bf16.msra.mxu0 %v1465
    %1510 = vmatprep.subr.bf16.mxu0 0
    %1511 = vmatpush1.bf16.msra.mxu0 %v1466
    %1512 = vmatprep.subr.bf16.mxu0 0
    %1513 = vmatpush1.bf16.msra.mxu0 %v1467
    %1514 = vmatprep.subr.bf16.mxu0 0
    %1515 = vmatpush1.bf16.msra.mxu0 %v1468
    %1516 = vmatprep.subr.bf16.mxu0 0
    %1517 = vmatpush1.bf16.msra.mxu0 %v1469
    %1518 = vmatprep.mubr.bf16.mxu0 %v1350
    %1519 = vmatmul.mubr.bf16.gmra.mrb[0].mxu0 %v1349
    %v1520 = vpop.f32.mrb[0].mxu0
    %v1521 = vadd.f32 %v1388, %v1520
    %v1522 = vpop.f32.mrb[0].mxu0
    %v1523 = vpop.f32.mrb[0].mxu0
    %v1524 = vpop.f32.mrb[0].mxu0
    %1525 = vdwg.mxu0
    %v1526 = vtanh.pop %v1521
    %1527 = vst [vmem:[%s176] sm:$0xff] %v1526
    %s1528 = scalar_lea.vmem [#allocation9], 32
    %1529 = vst [vmem:[%s1528] sm:$0xff] %v1526
    %v1530 = vld [vmem:[#allocation2] sm:$0xff]
    %s1531 = scalar_lea.vmem [#allocation3], 40
    %v1532 = vld [vmem:[%s1531] sm:$0xff]
    %v1533 = vpack.c.bf16 %v1530, %v1530
    %v1534 = vld [vmem:[#allocation6] sm:$0xf]
    %v1535 = vld [vmem:[#allocation6 + $0x4] sm:$0xf]
    %v1536 = vld [vmem:[#allocation6 + $0x8] sm:$0xf]
    %v1537 = vld [vmem:[#allocation6 + $0xc] sm:$0xf]
    %v1538 = vld [vmem:[#allocation6 + $0x10] sm:$0xf]
    %v1539 = vld [vmem:[#allocation6 + $0x14] sm:$0xf]
    %v1540 = vld [vmem:[#allocation6 + $0x18] sm:$0xf]
    %v1541 = vld [vmem:[#allocation6 + $0x1c] sm:$0xf]
    %v1542 = vld [vmem:[#allocation6 + $0x20] sm:$0xf]
    %v1543 = vld [vmem:[#allocation6 + $0x24] sm:$0xf]
    %v1544 = vld [vmem:[#allocation6 + $0x28] sm:$0xf]
    %v1545 = vld [vmem:[#allocation6 + $0x2c] sm:$0xf]
    %v1546 = vld [vmem:[#allocation6 + $0x30] sm:$0xf]
    %v1547 = vld [vmem:[#allocation6 + $0x34] sm:$0xf]
    %v1548 = vld [vmem:[#allocation6 + $0x38] sm:$0xf]
    %v1549 = vld [vmem:[#allocation6 + $0x3c] sm:$0xf]
    %v1566 = vunpack.c.l.b16 %v1534
    %v1567 = vunpack.c.l.b16 %v1535
    %v1568 = vunpack.c.l.b16 %v1536
    %v1569 = vunpack.c.l.b16 %v1537
    %v1570 = vunpack.c.l.b16 %v1538
    %v1571 = vunpack.c.l.b16 %v1539
    %v1572 = vunpack.c.l.b16 %v1540
    %v1573 = vunpack.c.l.b16 %v1541
    %v1574 = vunpack.c.l.b16 %v1542
    %v1575 = vunpack.c.l.b16 %v1543
    %v1576 = vunpack.c.l.b16 %v1544
    %v1577 = vunpack.c.l.b16 %v1545
    %v1578 = vunpack.c.l.b16 %v1546
    %v1579 = vunpack.c.l.b16 %v1547
    %v1580 = vunpack.c.l.b16 %v1548
    %v1581 = vunpack.c.l.b16 %v1549
    %v1582 = vpack.c.b16 %v1567, %v1566
    %v1583 = vpack.c.b16 %v1569, %v1568
    %v1584 = vpack.c.b16 %v1571, %v1570
    %v1585 = vpack.c.b16 %v1573, %v1572
    %v1586 = vpack.c.b16 %v1575, %v1574
    %v1587 = vpack.c.b16 %v1577, %v1576
    %v1588 = vpack.c.b16 %v1579, %v1578
    %v1589 = vpack.c.b16 %v1581, %v1580
    %1598 = vmatprep.subr.bf16.mxu0 0
    %1599 = vmatpush1.bf16.msra.mxu0 %v1582
    %1600 = vmatprep.subr.bf16.mxu0 0
    %1601 = vmatpush1.bf16.msra.mxu0 %v1583
    %1602 = vmatprep.subr.bf16.mxu0 0
    %1603 = vmatpush1.bf16.msra.mxu0 %v1584
    %1604 = vmatprep.subr.bf16.mxu0 0
    %1605 = vmatpush1.bf16.msra.mxu0 %v1585
    %1606 = vmatprep.subr.bf16.mxu0 0
    %1607 = vmatpush1.bf16.msra.mxu0 %v1586
    %1608 = vmatprep.subr.bf16.mxu0 0
    %1609 = vmatpush1.bf16.msra.mxu0 %v1587
    %1610 = vmatprep.subr.bf16.mxu0 0
    %1611 = vmatpush1.bf16.msra.mxu0 %v1588
    %1612 = vmatprep.subr.bf16.mxu0 0
    %1613 = vmatpush1.bf16.msra.mxu0 %v1589
    %1614 = vmatprep.subr.bf16.mxu0 0
    %1615 = vmatpush1.bf16.msra.mxu0 0
    %1616 = vmatprep.subr.bf16.mxu0 0
    %1617 = vmatpush1.bf16.msra.mxu0 0
    %1618 = vmatprep.subr.bf16.mxu0 0
    %1619 = vmatpush1.bf16.msra.mxu0 0
    %1620 = vmatprep.subr.bf16.mxu0 0
    %1621 = vmatpush1.bf16.msra.mxu0 0
    %1622 = vmatprep.subr.bf16.mxu0 0
    %1623 = vmatpush1.bf16.msra.mxu0 0
    %1624 = vmatprep.subr.bf16.mxu0 0
    %1625 = vmatpush1.bf16.msra.mxu0 0
    %1626 = vmatprep.subr.bf16.mxu0 0
    %1627 = vmatpush1.bf16.msra.mxu0 0
    %1628 = vmatprep.subr.bf16.mxu0 0
    %1629 = vmatpush1.bf16.msra.mxu0 0
    %1630 = vmatprep.mubr.bf16.mxu0 0
    %1631 = vmatmul.mubr.bf16.gmra.mrb[0].mxu0 %v1533
    %v1632 = vpop.f32.mrb[0].mxu0
    %v1633 = vadd.f32 0.0, %v1632
    %v1634 = vpop.f32.mrb[0].mxu0
    %v1635 = vpop.f32.mrb[0].mxu0
    %v1636 = vpop.f32.mrb[0].mxu0
    %1637 = vdwg.mxu0
    %v1638 = vadd.f32 %v1532, %v1633
    %v1639 = vtanh.pop %v1638
    %1640 = vst [vmem:[#allocation2] sm:$0xff] %v1639
    %v1641 = vld [vmem:[%s176] sm:$0xff]
    %v1642 = vpack.c.bf16 %v1639, %v1639
    %v1643 = vpack.c.bf16 %v1641, %v1641
    %v1644 = vld [vmem:[#allocation8] sm:$0xf]
    %v1645 = vld [vmem:[#allocation8 + $0x4] sm:$0xf]
    %v1646 = vld [vmem:[#allocation8 + $0x8] sm:$0xf]
    %v1647 = vld [vmem:[#allocation8 + $0xc] sm:$0xf]
    %v1648 = vld [vmem:[#allocation8 + $0x10] sm:$0xf]
    %v1649 = vld [vmem:[#allocation8 + $0x14] sm:$0xf]
    %v1650 = vld [vmem:[#allocation8 + $0x18] sm:$0xf]
    %v1651 = vld [vmem:[#allocation8 + $0x1c] sm:$0xf]
    %v1652 = vld [vmem:[#allocation8 + $0x20] sm:$0xf]
    %v1653 = vld [vmem:[#allocation8 + $0x24] sm:$0xf]
    %v1654 = vld [vmem:[#allocation8 + $0x28] sm:$0xf]
    %v1655 = vld [vmem:[#allocation8 + $0x2c] sm:$0xf]
    %v1656 = vld [vmem:[#allocation8 + $0x30] sm:$0xf]
    %v1657 = vld [vmem:[#allocation8 + $0x34] sm:$0xf]
    %v1658 = vld [vmem:[#allocation8 + $0x38] sm:$0xf]
    %v1659 = vld [vmem:[#allocation8 + $0x3c] sm:$0xf]
    %v1660 = vld [vmem:[#allocation8 + $0x40] sm:$0xf]
    %v1661 = vld [vmem:[#allocation8 + $0x44] sm:$0xf]
    %v1662 = vld [vmem:[#allocation8 + $0x48] sm:$0xf]
    %v1663 = vld [vmem:[#allocation8 + $0x4c] sm:$0xf]
    %v1664 = vld [vmem:[#allocation8 + $0x50] sm:$0xf]
    %v1665 = vld [vmem:[#allocation8 + $0x54] sm:$0xf]
    %v1666 = vld [vmem:[#allocation8 + $0x58] sm:$0xf]
    %v1667 = vld [vmem:[#allocation8 + $0x5c] sm:$0xf]
    %v1668 = vld [vmem:[#allocation8 + $0x60] sm:$0xf]
    %v1669 = vld [vmem:[#allocation8 + $0x64] sm:$0xf]
    %v1670 = vld [vmem:[#allocation8 + $0x68] sm:$0xf]
    %v1671 = vld [vmem:[#allocation8 + $0x6c] sm:$0xf]
    %v1672 = vld [vmem:[#allocation8 + $0x70] sm:$0xf]
    %v1673 = vld [vmem:[#allocation8 + $0x74] sm:$0xf]
    %v1674 = vld [vmem:[#allocation8 + $0x78] sm:$0xf]
    %v1675 = vld [vmem:[#allocation8 + $0x7c] sm:$0xf]
    %v1676 = vld [vmem:[%s3] sm:$0x1]
    %v1678 = vlaneseq
    %v1679 = vshrl.u32 %v1678, 7
    %v1680 = vsub.s32 0, %v1679
    %v1681 = vrot.slane %v1676, %v1680
    %v1715 = vunpack.c.l.b16 %v1644
    %v1716 = vunpack.c.l.b16 %v1645
    %v1717 = vunpack.c.l.b16 %v1646
    %v1718 = vunpack.c.l.b16 %v1647
    %v1719 = vunpack.c.l.b16 %v1648
    %v1720 = vunpack.c.l.b16 %v1649
    %v1721 = vunpack.c.l.b16 %v1650
    %v1722 = vunpack.c.l.b16 %v1651
    %v1723 = vunpack.c.l.b16 %v1652
    %v1724 = vunpack.c.l.b16 %v1653
    %v1725 = vunpack.c.l.b16 %v1654
    %v1726 = vunpack.c.l.b16 %v1655
    %v1727 = vunpack.c.l.b16 %v1656
    %v1728 = vunpack.c.l.b16 %v1657
    %v1729 = vunpack.c.l.b16 %v1658
    %v1730 = vunpack.c.l.b16 %v1659
    %v1731 = vunpack.c.l.b16 %v1660
    %v1732 = vunpack.c.l.b16 %v1661
    %v1733 = vunpack.c.l.b16 %v1662
    %v1734 = vunpack.c.l.b16 %v1663
    %v1735 = vunpack.c.l.b16 %v1664
    %v1736 = vunpack.c.l.b16 %v1665
    %v1737 = vunpack.c.l.b16 %v1666
    %v1738 = vunpack.c.l.b16 %v1667
    %v1739 = vunpack.c.l.b16 %v1668
    %v1740 = vunpack.c.l.b16 %v1669
    %v1741 = vunpack.c.l.b16 %v1670
    %v1742 = vunpack.c.l.b16 %v1671
    %v1743 = vunpack.c.l.b16 %v1672
    %v1744 = vunpack.c.l.b16 %v1673
    %v1745 = vunpack.c.l.b16 %v1674
    %v1746 = vunpack.c.l.b16 %v1675
    %v1747 = vpack.c.b16 %v1716, %v1715
    %v1748 = vpack.c.b16 %v1718, %v1717
    %v1749 = vpack.c.b16 %v1720, %v1719
    %v1750 = vpack.c.b16 %v1722, %v1721
    %v1751 = vpack.c.b16 %v1724, %v1723
    %v1752 = vpack.c.b16 %v1726, %v1725
    %v1753 = vpack.c.b16 %v1728, %v1727
    %v1754 = vpack.c.b16 %v1730, %v1729
    %v1755 = vpack.c.b16 %v1732, %v1731
    %v1756 = vpack.c.b16 %v1734, %v1733
    %v1757 = vpack.c.b16 %v1736, %v1735
    %v1758 = vpack.c.b16 %v1738, %v1737
    %v1759 = vpack.c.b16 %v1740, %v1739
    %v1760 = vpack.c.b16 %v1742, %v1741
    %v1761 = vpack.c.b16 %v1744, %v1743
    %v1762 = vpack.c.b16 %v1746, %v1745
    %1779 = vmatprep.subr.bf16.mxu0 0
    %1780 = vmatpush1.bf16.msra.mxu0 %v1747
    %1781 = vmatprep.subr.bf16.mxu0 0
    %1782 = vmatpush1.bf16.msra.mxu0 %v1748
    %1783 = vmatprep.subr.bf16.mxu0 0
    %1784 = vmatpush1.bf16.msra.mxu0 %v1749
    %1785 = vmatprep.subr.bf16.mxu0 0
    %1786 = vmatpush1.bf16.msra.mxu0 %v1750
    %1787 = vmatprep.subr.bf16.mxu0 0
    %1788 = vmatpush1.bf16.msra.mxu0 %v1751
    %1789 = vmatprep.subr.bf16.mxu0 0
    %1790 = vmatpush1.bf16.msra.mxu0 %v1752
    %1791 = vmatprep.subr.bf16.mxu0 0
    %1792 = vmatpush1.bf16.msra.mxu0 %v1753
    %1793 = vmatprep.subr.bf16.mxu0 0
    %1794 = vmatpush1.bf16.msra.mxu0 %v1754
    %1795 = vmatprep.subr.bf16.mxu0 0
    %1796 = vmatpush1.bf16.msra.mxu0 %v1755
    %1797 = vmatprep.subr.bf16.mxu0 0
    %1798 = vmatpush1.bf16.msra.mxu0 %v1756
    %1799 = vmatprep.subr.bf16.mxu0 0
    %1800 = vmatpush1.bf16.msra.mxu0 %v1757
    %1801 = vmatprep.subr.bf16.mxu0 0
    %1802 = vmatpush1.bf16.msra.mxu0 %v1758
    %1803 = vmatprep.subr.bf16.mxu0 0
    %1804 = vmatpush1.bf16.msra.mxu0 %v1759
    %1805 = vmatprep.subr.bf16.mxu0 0
    %1806 = vmatpush1.bf16.msra.mxu0 %v1760
    %1807 = vmatprep.subr.bf16.mxu0 0
    %1808 = vmatpush1.bf16.msra.mxu0 %v1761
    %1809 = vmatprep.subr.bf16.mxu0 0
    %1810 = vmatpush1.bf16.msra.mxu0 %v1762
    %1811 = vmatprep.mubr.bf16.mxu0 %v1643
    %1812 = vmatmul.mubr.bf16.gmra.mrb[0].mxu0 %v1642
    %v1813 = vpop.f32.mrb[0].mxu0
    %v1814 = vadd.f32 %v1681, %v1813
    %v1815 = vpop.f32.mrb[0].mxu0
    %v1816 = vpop.f32.mrb[0].mxu0
    %v1817 = vpop.f32.mrb[0].mxu0
    %1818 = vdwg.mxu0
    %v1819 = vtanh.pop %v1814
    %1820 = vst [vmem:[%s176] sm:$0xff] %v1819
    %s1821 = scalar_lea.vmem [#allocation9], 40
    %1822 = vst [vmem:[%s1821] sm:$0xff] %v1819
    %v1823 = vld [vmem:[#allocation2] sm:$0xff]
    %s1824 = scalar_lea.vmem [#allocation3], 48
    %v1825 = vld [vmem:[%s1824] sm:$0xff]
    %v1826 = vpack.c.bf16 %v1823, %v1823
    %v1827 = vld [vmem:[#allocation6] sm:$0xf]
    %v1828 = vld [vmem:[#allocation6 + $0x4] sm:$0xf]
    %v1829 = vld [vmem:[#allocation6 + $0x8] sm:$0xf]
    %v1830 = vld [vmem:[#allocation6 + $0xc] sm:$0xf]
    %v1831 = vld [vmem:[#allocation6 + $0x10] sm:$0xf]
    %v1832 = vld [vmem:[#allocation6 + $0x14] sm:$0xf]
    %v1833 = vld [vmem:[#allocation6 + $0x18] sm:$0xf]
    %v1834 = vld [vmem:[#allocation6 + $0x1c] sm:$0xf]
    %v1835 = vld [vmem:[#allocation6 + $0x20] sm:$0xf]
    %v1836 = vld [vmem:[#allocation6 + $0x24] sm:$0xf]
    %v1837 = vld [vmem:[#allocation6 + $0x28] sm:$0xf]
    %v1838 = vld [vmem:[#allocation6 + $0x2c] sm:$0xf]
    %v1839 = vld [vmem:[#allocation6 + $0x30] sm:$0xf]
    %v1840 = vld [vmem:[#allocation6 + $0x34] sm:$0xf]
    %v1841 = vld [vmem:[#allocation6 + $0x38] sm:$0xf]
    %v1842 = vld [vmem:[#allocation6 + $0x3c] sm:$0xf]
    %v1859 = vunpack.c.l.b16 %v1827
    %v1860 = vunpack.c.l.b16 %v1828
    %v1861 = vunpack.c.l.b16 %v1829
    %v1862 = vunpack.c.l.b16 %v1830
    %v1863 = vunpack.c.l.b16 %v1831
    %v1864 = vunpack.c.l.b16 %v1832
    %v1865 = vunpack.c.l.b16 %v1833
    %v1866 = vunpack.c.l.b16 %v1834
    %v1867 = vunpack.c.l.b16 %v1835
    %v1868 = vunpack.c.l.b16 %v1836
    %v1869 = vunpack.c.l.b16 %v1837
    %v1870 = vunpack.c.l.b16 %v1838
    %v1871 = vunpack.c.l.b16 %v1839
    %v1872 = vunpack.c.l.b16 %v1840
    %v1873 = vunpack.c.l.b16 %v1841
    %v1874 = vunpack.c.l.b16 %v1842
    %v1875 = vpack.c.b16 %v1860, %v1859
    %v1876 = vpack.c.b16 %v1862, %v1861
    %v1877 = vpack.c.b16 %v1864, %v1863
    %v1878 = vpack.c.b16 %v1866, %v1865
    %v1879 = vpack.c.b16 %v1868, %v1867
    %v1880 = vpack.c.b16 %v1870, %v1869
    %v1881 = vpack.c.b16 %v1872, %v1871
    %v1882 = vpack.c.b16 %v1874, %v1873
    %1891 = vmatprep.subr.bf16.mxu0 0
    %1892 = vmatpush1.bf16.msra.mxu0 %v1875
    %1893 = vmatprep.subr.bf16.mxu0 0
    %1894 = vmatpush1.bf16.msra.mxu0 %v1876
    %1895 = vmatprep.subr.bf16.mxu0 0
    %1896 = vmatpush1.bf16.msra.mxu0 %v1877
    %1897 = vmatprep.subr.bf16.mxu0 0
    %1898 = vmatpush1.bf16.msra.mxu0 %v1878
    %1899 = vmatprep.subr.bf16.mxu0 0
    %1900 = vmatpush1.bf16.msra.mxu0 %v1879
    %1901 = vmatprep.subr.bf16.mxu0 0
    %1902 = vmatpush1.bf16.msra.mxu0 %v1880
    %1903 = vmatprep.subr.bf16.mxu0 0
    %1904 = vmatpush1.bf16.msra.mxu0 %v1881
    %1905 = vmatprep.subr.bf16.mxu0 0
    %1906 = vmatpush1.bf16.msra.mxu0 %v1882
    %1907 = vmatprep.subr.bf16.mxu0 0
    %1908 = vmatpush1.bf16.msra.mxu0 0
    %1909 = vmatprep.subr.bf16.mxu0 0
    %1910 = vmatpush1.bf16.msra.mxu0 0
    %1911 = vmatprep.subr.bf16.mxu0 0
    %1912 = vmatpush1.bf16.msra.mxu0 0
    %1913 = vmatprep.subr.bf16.mxu0 0
    %1914 = vmatpush1.bf16.msra.mxu0 0
    %1915 = vmatprep.subr.bf16.mxu0 0
    %1916 = vmatpush1.bf16.msra.mxu0 0
    %1917 = vmatprep.subr.bf16.mxu0 0
    %1918 = vmatpush1.bf16.msra.mxu0 0
    %1919 = vmatprep.subr.bf16.mxu0 0
    %1920 = vmatpush1.bf16.msra.mxu0 0
    %1921 = vmatprep.subr.bf16.mxu0 0
    %1922 = vmatpush1.bf16.msra.mxu0 0
    %1923 = vmatprep.mubr.bf16.mxu0 0
    %1924 = vmatmul.mubr.bf16.gmra.mrb[0].mxu0 %v1826
    %v1925 = vpop.f32.mrb[0].mxu0
    %v1926 = vadd.f32 0.0, %v1925
    %v1927 = vpop.f32.mrb[0].mxu0
    %v1928 = vpop.f32.mrb[0].mxu0
    %v1929 = vpop.f32.mrb[0].mxu0
    %1930 = vdwg.mxu0
    %v1931 = vadd.f32 %v1825, %v1926
    %v1932 = vtanh.pop %v1931
    %1933 = vst [vmem:[#allocation2] sm:$0xff] %v1932
    %v1934 = vld [vmem:[%s176] sm:$0xff]
    %v1935 = vpack.c.bf16 %v1932, %v1932
    %v1936 = vpack.c.bf16 %v1934, %v1934
    %v1937 = vld [vmem:[#allocation8] sm:$0xf]
    %v1938 = vld [vmem:[#allocation8 + $0x4] sm:$0xf]
    %v1939 = vld [vmem:[#allocation8 + $0x8] sm:$0xf]
    %v1940 = vld [vmem:[#allocation8 + $0xc] sm:$0xf]
    %v1941 = vld [vmem:[#allocation8 + $0x10] sm:$0xf]
    %v1942 = vld [vmem:[#allocation8 + $0x14] sm:$0xf]
    %v1943 = vld [vmem:[#allocation8 + $0x18] sm:$0xf]
    %v1944 = vld [vmem:[#allocation8 + $0x1c] sm:$0xf]
    %v1945 = vld [vmem:[#allocation8 + $0x20] sm:$0xf]
    %v1946 = vld [vmem:[#allocation8 + $0x24] sm:$0xf]
    %v1947 = vld [vmem:[#allocation8 + $0x28] sm:$0xf]
    %v1948 = vld [vmem:[#allocation8 + $0x2c] sm:$0xf]
    %v1949 = vld [vmem:[#allocation8 + $0x30] sm:$0xf]
    %v1950 = vld [vmem:[#allocation8 + $0x34] sm:$0xf]
    %v1951 = vld [vmem:[#allocation8 + $0x38] sm:$0xf]
    %v1952 = vld [vmem:[#allocation8 + $0x3c] sm:$0xf]
    %v1953 = vld [vmem:[#allocation8 + $0x40] sm:$0xf]
    %v1954 = vld [vmem:[#allocation8 + $0x44] sm:$0xf]
    %v1955 = vld [vmem:[#allocation8 + $0x48] sm:$0xf]
    %v1956 = vld [vmem:[#allocation8 + $0x4c] sm:$0xf]
    %v1957 = vld [vmem:[#allocation8 + $0x50] sm:$0xf]
    %v1958 = vld [vmem:[#allocation8 + $0x54] sm:$0xf]
    %v1959 = vld [vmem:[#allocation8 + $0x58] sm:$0xf]
    %v1960 = vld [vmem:[#allocation8 + $0x5c] sm:$0xf]
    %v1961 = vld [vmem:[#allocation8 + $0x60] sm:$0xf]
    %v1962 = vld [vmem:[#allocation8 + $0x64] sm:$0xf]
    %v1963 = vld [vmem:[#allocation8 + $0x68] sm:$0xf]
    %v1964 = vld [vmem:[#allocation8 + $0x6c] sm:$0xf]
    %v1965 = vld [vmem:[#allocation8 + $0x70] sm:$0xf]
    %v1966 = vld [vmem:[#allocation8 + $0x74] sm:$0xf]
    %v1967 = vld [vmem:[#allocation8 + $0x78] sm:$0xf]
    %v1968 = vld [vmem:[#allocation8 + $0x7c] sm:$0xf]
    %v1969 = vld [vmem:[%s3] sm:$0x1]
    %v1971 = vlaneseq
    %v1972 = vshrl.u32 %v1971, 7
    %v1973 = vsub.s32 0, %v1972
    %v1974 = vrot.slane %v1969, %v1973
    %v2008 = vunpack.c.l.b16 %v1937
    %v2009 = vunpack.c.l.b16 %v1938
    %v2010 = vunpack.c.l.b16 %v1939
    %v2011 = vunpack.c.l.b16 %v1940
    %v2012 = vunpack.c.l.b16 %v1941
    %v2013 = vunpack.c.l.b16 %v1942
    %v2014 = vunpack.c.l.b16 %v1943
    %v2015 = vunpack.c.l.b16 %v1944
    %v2016 = vunpack.c.l.b16 %v1945
    %v2017 = vunpack.c.l.b16 %v1946
    %v2018 = vunpack.c.l.b16 %v1947
    %v2019 = vunpack.c.l.b16 %v1948
    %v2020 = vunpack.c.l.b16 %v1949
    %v2021 = vunpack.c.l.b16 %v1950
    %v2022 = vunpack.c.l.b16 %v1951
    %v2023 = vunpack.c.l.b16 %v1952
    %v2024 = vunpack.c.l.b16 %v1953
    %v2025 = vunpack.c.l.b16 %v1954
    %v2026 = vunpack.c.l.b16 %v1955
    %v2027 = vunpack.c.l.b16 %v1956
    %v2028 = vunpack.c.l.b16 %v1957
    %v2029 = vunpack.c.l.b16 %v1958
    %v2030 = vunpack.c.l.b16 %v1959
    %v2031 = vunpack.c.l.b16 %v1960
    %v2032 = vunpack.c.l.b16 %v1961
    %v2033 = vunpack.c.l.b16 %v1962
    %v2034 = vunpack.c.l.b16 %v1963
    %v2035 = vunpack.c.l.b16 %v1964
    %v2036 = vunpack.c.l.b16 %v1965
    %v2037 = vunpack.c.l.b16 %v1966
    %v2038 = vunpack.c.l.b16 %v1967
    %v2039 = vunpack.c.l.b16 %v1968
    %v2040 = vpack.c.b16 %v2009, %v2008
    %v2041 = vpack.c.b16 %v2011, %v2010
    %v2042 = vpack.c.b16 %v2013, %v2012
    %v2043 = vpack.c.b16 %v2015, %v2014
    %v2044 = vpack.c.b16 %v2017, %v2016
    %v2045 = vpack.c.b16 %v2019, %v2018
    %v2046 = vpack.c.b16 %v2021, %v2020
    %v2047 = vpack.c.b16 %v2023, %v2022
    %v2048 = vpack.c.b16 %v2025, %v2024
    %v2049 = vpack.c.b16 %v2027, %v2026
    %v2050 = vpack.c.b16 %v2029, %v2028
    %v2051 = vpack.c.b16 %v2031, %v2030
    %v2052 = vpack.c.b16 %v2033, %v2032
    %v2053 = vpack.c.b16 %v2035, %v2034
    %v2054 = vpack.c.b16 %v2037, %v2036
    %v2055 = vpack.c.b16 %v2039, %v2038
    %2072 = vmatprep.subr.bf16.mxu0 0
    %2073 = vmatpush1.bf16.msra.mxu0 %v2040
    %2074 = vmatprep.subr.bf16.mxu0 0
    %2075 = vmatpush1.bf16.msra.mxu0 %v2041
    %2076 = vmatprep.subr.bf16.mxu0 0
    %2077 = vmatpush1.bf16.msra.mxu0 %v2042
    %2078 = vmatprep.subr.bf16.mxu0 0
    %2079 = vmatpush1.bf16.msra.mxu0 %v2043
    %2080 = vmatprep.subr.bf16.mxu0 0
    %2081 = vmatpush1.bf16.msra.mxu0 %v2044
    %2082 = vmatprep.subr.bf16.mxu0 0
    %2083 = vmatpush1.bf16.msra.mxu0 %v2045
    %2084 = vmatprep.subr.bf16.mxu0 0
    %2085 = vmatpush1.bf16.msra.mxu0 %v2046
    %2086 = vmatprep.subr.bf16.mxu0 0
    %2087 = vmatpush1.bf16.msra.mxu0 %v2047
    %2088 = vmatprep.subr.bf16.mxu0 0
    %2089 = vmatpush1.bf16.msra.mxu0 %v2048
    %2090 = vmatprep.subr.bf16.mxu0 0
    %2091 = vmatpush1.bf16.msra.mxu0 %v2049
    %2092 = vmatprep.subr.bf16.mxu0 0
    %2093 = vmatpush1.bf16.msra.mxu0 %v2050
    %2094 = vmatprep.subr.bf16.mxu0 0
    %2095 = vmatpush1.bf16.msra.mxu0 %v2051
    %2096 = vmatprep.subr.bf16.mxu0 0
    %2097 = vmatpush1.bf16.msra.mxu0 %v2052
    %2098 = vmatprep.subr.bf16.mxu0 0
    %2099 = vmatpush1.bf16.msra.mxu0 %v2053
    %2100 = vmatprep.subr.bf16.mxu0 0
    %2101 = vmatpush1.bf16.msra.mxu0 %v2054
    %2102 = vmatprep.subr.bf16.mxu0 0
    %2103 = vmatpush1.bf16.msra.mxu0 %v2055
    %2104 = vmatprep.mubr.bf16.mxu0 %v1936
    %2105 = vmatmul.mubr.bf16.gmra.mrb[0].mxu0 %v1935
    %v2106 = vpop.f32.mrb[0].mxu0
    %v2107 = vadd.f32 %v1974, %v2106
    %v2108 = vpop.f32.mrb[0].mxu0
    %v2109 = vpop.f32.mrb[0].mxu0
    %v2110 = vpop.f32.mrb[0].mxu0
    %2111 = vdwg.mxu0
    %v2112 = vtanh.pop %v2107
    %2113 = vst [vmem:[%s176] sm:$0xff] %v2112
    %s2114 = scalar_lea.vmem [#allocation9], 48
    %2115 = vst [vmem:[%s2114] sm:$0xff] %v2112
    %v2116 = vld [vmem:[#allocation2] sm:$0xff]
    %s2117 = scalar_lea.vmem [#allocation3], 56
    %v2118 = vld [vmem:[%s2117] sm:$0xff]
    %v2119 = vpack.c.bf16 %v2116, %v2116
    %v2120 = vld [vmem:[#allocation6] sm:$0xf]
    %v2121 = vld [vmem:[#allocation6 + $0x4] sm:$0xf]
    %v2122 = vld [vmem:[#allocation6 + $0x8] sm:$0xf]
    %v2123 = vld [vmem:[#allocation6 + $0xc] sm:$0xf]
    %v2124 = vld [vmem:[#allocation6 + $0x10] sm:$0xf]
    %v2125 = vld [vmem:[#allocation6 + $0x14] sm:$0xf]
    %v2126 = vld [vmem:[#allocation6 + $0x18] sm:$0xf]
    %v2127 = vld [vmem:[#allocation6 + $0x1c] sm:$0xf]
    %v2128 = vld [vmem:[#allocation6 + $0x20] sm:$0xf]
    %v2129 = vld [vmem:[#allocation6 + $0x24] sm:$0xf]
    %v2130 = vld [vmem:[#allocation6 + $0x28] sm:$0xf]
    %v2131 = vld [vmem:[#allocation6 + $0x2c] sm:$0xf]
    %v2132 = vld [vmem:[#allocation6 + $0x30] sm:$0xf]
    %v2133 = vld [vmem:[#allocation6 + $0x34] sm:$0xf]
    %v2134 = vld [vmem:[#allocation6 + $0x38] sm:$0xf]
    %v2135 = vld [vmem:[#allocation6 + $0x3c] sm:$0xf]
    %v2152 = vunpack.c.l.b16 %v2120
    %v2153 = vunpack.c.l.b16 %v2121
    %v2154 = vunpack.c.l.b16 %v2122
    %v2155 = vunpack.c.l.b16 %v2123
    %v2156 = vunpack.c.l.b16 %v2124
    %v2157 = vunpack.c.l.b16 %v2125
    %v2158 = vunpack.c.l.b16 %v2126
    %v2159 = vunpack.c.l.b16 %v2127
    %v2160 = vunpack.c.l.b16 %v2128
    %v2161 = vunpack.c.l.b16 %v2129
    %v2162 = vunpack.c.l.b16 %v2130
    %v2163 = vunpack.c.l.b16 %v2131
    %v2164 = vunpack.c.l.b16 %v2132
    %v2165 = vunpack.c.l.b16 %v2133
    %v2166 = vunpack.c.l.b16 %v2134
    %v2167 = vunpack.c.l.b16 %v2135
    %v2168 = vpack.c.b16 %v2153, %v2152
    %v2169 = vpack.c.b16 %v2155, %v2154
    %v2170 = vpack.c.b16 %v2157, %v2156
    %v2171 = vpack.c.b16 %v2159, %v2158
    %v2172 = vpack.c.b16 %v2161, %v2160
    %v2173 = vpack.c.b16 %v2163, %v2162
    %v2174 = vpack.c.b16 %v2165, %v2164
    %v2175 = vpack.c.b16 %v2167, %v2166
    %2184 = vmatprep.subr.bf16.mxu0 0
    %2185 = vmatpush1.bf16.msra.mxu0 %v2168
    %2186 = vmatprep.subr.bf16.mxu0 0
    %2187 = vmatpush1.bf16.msra.mxu0 %v2169
    %2188 = vmatprep.subr.bf16.mxu0 0
    %2189 = vmatpush1.bf16.msra.mxu0 %v2170
    %2190 = vmatprep.subr.bf16.mxu0 0
    %2191 = vmatpush1.bf16.msra.mxu0 %v2171
    %2192 = vmatprep.subr.bf16.mxu0 0
    %2193 = vmatpush1.bf16.msra.mxu0 %v2172
    %2194 = vmatprep.subr.bf16.mxu0 0
    %2195 = vmatpush1.bf16.msra.mxu0 %v2173
    %2196 = vmatprep.subr.bf16.mxu0 0
    %2197 = vmatpush1.bf16.msra.mxu0 %v2174
    %2198 = vmatprep.subr.bf16.mxu0 0
    %2199 = vmatpush1.bf16.msra.mxu0 %v2175
    %2200 = vmatprep.subr.bf16.mxu0 0
    %2201 = vmatpush1.bf16.msra.mxu0 0
    %2202 = vmatprep.subr.bf16.mxu0 0
    %2203 = vmatpush1.bf16.msra.mxu0 0
    %2204 = vmatprep.subr.bf16.mxu0 0
    %2205 = vmatpush1.bf16.msra.mxu0 0
    %2206 = vmatprep.subr.bf16.mxu0 0
    %2207 = vmatpush1.bf16.msra.mxu0 0
    %2208 = vmatprep.subr.bf16.mxu0 0
    %2209 = vmatpush1.bf16.msra.mxu0 0
    %2210 = vmatprep.subr.bf16.mxu0 0
    %2211 = vmatpush1.bf16.msra.mxu0 0
    %2212 = vmatprep.subr.bf16.mxu0 0
    %2213 = vmatpush1.bf16.msra.mxu0 0
    %2214 = vmatprep.subr.bf16.mxu0 0
    %2215 = vmatpush1.bf16.msra.mxu0 0
    %2216 = vmatprep.mubr.bf16.mxu0 0
    %2217 = vmatmul.mubr.bf16.gmra.mrb[0].mxu0 %v2119
    %v2218 = vpop.f32.mrb[0].mxu0
    %v2219 = vadd.f32 0.0, %v2218
    %v2220 = vpop.f32.mrb[0].mxu0
    %v2221 = vpop.f32.mrb[0].mxu0
    %v2222 = vpop.f32.mrb[0].mxu0
    %2223 = vdwg.mxu0
    %v2224 = vadd.f32 %v2118, %v2219
    %v2225 = vtanh.pop %v2224
    %2226 = vst [vmem:[#allocation2] sm:$0xff] %v2225
    %v2227 = vld [vmem:[%s176] sm:$0xff]
    %v2228 = vpack.c.bf16 %v2225, %v2225
    %v2229 = vpack.c.bf16 %v2227, %v2227
    %v2230 = vld [vmem:[#allocation8] sm:$0xf]
    %v2231 = vld [vmem:[#allocation8 + $0x4] sm:$0xf]
    %v2232 = vld [vmem:[#allocation8 + $0x8] sm:$0xf]
    %v2233 = vld [vmem:[#allocation8 + $0xc] sm:$0xf]
    %v2234 = vld [vmem:[#allocation8 + $0x10] sm:$0xf]
    %v2235 = vld [vmem:[#allocation8 + $0x14] sm:$0xf]
    %v2236 = vld [vmem:[#allocation8 + $0x18] sm:$0xf]
    %v2237 = vld [vmem:[#allocation8 + $0x1c] sm:$0xf]
    %v2238 = vld [vmem:[#allocation8 + $0x20] sm:$0xf]
    %v2239 = vld [vmem:[#allocation8 + $0x24] sm:$0xf]
    %v2240 = vld [vmem:[#allocation8 + $0x28] sm:$0xf]
    %v2241 = vld [vmem:[#allocation8 + $0x2c] sm:$0xf]
    %v2242 = vld [vmem:[#allocation8 + $0x30] sm:$0xf]
    %v2243 = vld [vmem:[#allocation8 + $0x34] sm:$0xf]
    %v2244 = vld [vmem:[#allocation8 + $0x38] sm:$0xf]
    %v2245 = vld [vmem:[#allocation8 + $0x3c] sm:$0xf]
    %v2246 = vld [vmem:[#allocation8 + $0x40] sm:$0xf]
    %v2247 = vld [vmem:[#allocation8 + $0x44] sm:$0xf]
    %v2248 = vld [vmem:[#allocation8 + $0x48] sm:$0xf]
    %v2249 = vld [vmem:[#allocation8 + $0x4c] sm:$0xf]
    %v2250 = vld [vmem:[#allocation8 + $0x50] sm:$0xf]
    %v2251 = vld [vmem:[#allocation8 + $0x54] sm:$0xf]
    %v2252 = vld [vmem:[#allocation8 + $0x58] sm:$0xf]
    %v2253 = vld [vmem:[#allocation8 + $0x5c] sm:$0xf]
    %v2254 = vld [vmem:[#allocation8 + $0x60] sm:$0xf]
    %v2255 = vld [vmem:[#allocation8 + $0x64] sm:$0xf]
    %v2256 = vld [vmem:[#allocation8 + $0x68] sm:$0xf]
    %v2257 = vld [vmem:[#allocation8 + $0x6c] sm:$0xf]
    %v2258 = vld [vmem:[#allocation8 + $0x70] sm:$0xf]
    %v2259 = vld [vmem:[#allocation8 + $0x74] sm:$0xf]
    %v2260 = vld [vmem:[#allocation8 + $0x78] sm:$0xf]
    %v2261 = vld [vmem:[#allocation8 + $0x7c] sm:$0xf]
    %v2262 = vld [vmem:[%s3] sm:$0x1]
    %v2264 = vlaneseq
    %v2265 = vshrl.u32 %v2264, 7
    %v2266 = vsub.s32 0, %v2265
    %v2267 = vrot.slane %v2262, %v2266
    %v2301 = vunpack.c.l.b16 %v2230
    %v2302 = vunpack.c.l.b16 %v2231
    %v2303 = vunpack.c.l.b16 %v2232
    %v2304 = vunpack.c.l.b16 %v2233
    %v2305 = vunpack.c.l.b16 %v2234
    %v2306 = vunpack.c.l.b16 %v2235
    %v2307 = vunpack.c.l.b16 %v2236
    %v2308 = vunpack.c.l.b16 %v2237
    %v2309 = vunpack.c.l.b16 %v2238
    %v2310 = vunpack.c.l.b16 %v2239
    %v2311 = vunpack.c.l.b16 %v2240
    %v2312 = vunpack.c.l.b16 %v2241
    %v2313 = vunpack.c.l.b16 %v2242
    %v2314 = vunpack.c.l.b16 %v2243
    %v2315 = vunpack.c.l.b16 %v2244
    %v2316 = vunpack.c.l.b16 %v2245
    %v2317 = vunpack.c.l.b16 %v2246
    %v2318 = vunpack.c.l.b16 %v2247
    %v2319 = vunpack.c.l.b16 %v2248
    %v2320 = vunpack.c.l.b16 %v2249
    %v2321 = vunpack.c.l.b16 %v2250
    %v2322 = vunpack.c.l.b16 %v2251
    %v2323 = vunpack.c.l.b16 %v2252
    %v2324 = vunpack.c.l.b16 %v2253
    %v2325 = vunpack.c.l.b16 %v2254
    %v2326 = vunpack.c.l.b16 %v2255
    %v2327 = vunpack.c.l.b16 %v2256
    %v2328 = vunpack.c.l.b16 %v2257
    %v2329 = vunpack.c.l.b16 %v2258
    %v2330 = vunpack.c.l.b16 %v2259
    %v2331 = vunpack.c.l.b16 %v2260
    %v2332 = vunpack.c.l.b16 %v2261
    %v2333 = vpack.c.b16 %v2302, %v2301
    %v2334 = vpack.c.b16 %v2304, %v2303
    %v2335 = vpack.c.b16 %v2306, %v2305
    %v2336 = vpack.c.b16 %v2308, %v2307
    %v2337 = vpack.c.b16 %v2310, %v2309
    %v2338 = vpack.c.b16 %v2312, %v2311
    %v2339 = vpack.c.b16 %v2314, %v2313
    %v2340 = vpack.c.b16 %v2316, %v2315
    %v2341 = vpack.c.b16 %v2318, %v2317
    %v2342 = vpack.c.b16 %v2320, %v2319
    %v2343 = vpack.c.b16 %v2322, %v2321
    %v2344 = vpack.c.b16 %v2324, %v2323
    %v2345 = vpack.c.b16 %v2326, %v2325
    %v2346 = vpack.c.b16 %v2328, %v2327
    %v2347 = vpack.c.b16 %v2330, %v2329
    %v2348 = vpack.c.b16 %v2332, %v2331
    %2365 = vmatprep.subr.bf16.mxu0 0
    %2366 = vmatpush1.bf16.msra.mxu0 %v2333
    %2367 = vmatprep.subr.bf16.mxu0 0
    %2368 = vmatpush1.bf16.msra.mxu0 %v2334
    %2369 = vmatprep.subr.bf16.mxu0 0
    %2370 = vmatpush1.bf16.msra.mxu0 %v2335
    %2371 = vmatprep.subr.bf16.mxu0 0
    %2372 = vmatpush1.bf16.msra.mxu0 %v2336
    %2373 = vmatprep.subr.bf16.mxu0 0
    %2374 = vmatpush1.bf16.msra.mxu0 %v2337
    %2375 = vmatprep.subr.bf16.mxu0 0
    %2376 = vmatpush1.bf16.msra.mxu0 %v2338
    %2377 = vmatprep.subr.bf16.mxu0 0
    %2378 = vmatpush1.bf16.msra.mxu0 %v2339
    %2379 = vmatprep.subr.bf16.mxu0 0
    %2380 = vmatpush1.bf16.msra.mxu0 %v2340
    %2381 = vmatprep.subr.bf16.mxu0 0
    %2382 = vmatpush1.bf16.msra.mxu0 %v2341
    %2383 = vmatprep.subr.bf16.mxu0 0
    %2384 = vmatpush1.bf16.msra.mxu0 %v2342
    %2385 = vmatprep.subr.bf16.mxu0 0
    %2386 = vmatpush1.bf16.msra.mxu0 %v2343
    %2387 = vmatprep.subr.bf16.mxu0 0
    %2388 = vmatpush1.bf16.msra.mxu0 %v2344
    %2389 = vmatprep.subr.bf16.mxu0 0
    %2390 = vmatpush1.bf16.msra.mxu0 %v2345
    %2391 = vmatprep.subr.bf16.mxu0 0
    %2392 = vmatpush1.bf16.msra.mxu0 %v2346
    %2393 = vmatprep.subr.bf16.mxu0 0
    %2394 = vmatpush1.bf16.msra.mxu0 %v2347
    %2395 = vmatprep.subr.bf16.mxu0 0
    %2396 = vmatpush1.bf16.msra.mxu0 %v2348
    %2397 = vmatprep.mubr.bf16.mxu0 %v2229
    %2398 = vmatmul.mubr.bf16.gmra.mrb[0].mxu0 %v2228
    %v2399 = vpop.f32.mrb[0].mxu0
    %v2400 = vadd.f32 %v2267, %v2399
    %v2401 = vpop.f32.mrb[0].mxu0
    %v2402 = vpop.f32.mrb[0].mxu0
    %v2403 = vpop.f32.mrb[0].mxu0
    %2404 = vdwg.mxu0
    %v2405 = vtanh.pop %v2400
    %2406 = vst [vmem:[%s176] sm:$0xff] %v2405
    %s2407 = scalar_lea.vmem [#allocation9], 56
    %2408 = vst [vmem:[%s2407] sm:$0xff] %v2405
    // Predicated region
    $region34: #{tpu_custom_call.1} parent=1 // pred_check
      _
    $region35: #{tpu_custom_call.1} parent=1 // pred_check_branch
      %2410 = sbr.rel (0) target = $region37
    $region36: #{tpu_custom_call.1} parent=1 // pred_region
      %s2412 = ssub.s32 1024, 1024
      %2413 = vsyncadd [#allocation5], %s2412
      %s2414 = sshll.u32 [#allocation9], 4
      %s2415 = int_to_ptr.vmem [resolvable:$true] %s2414
      %2420 = dma.vmem_to_hbm [thread:$0]  %s2415, 1024, %s4, [#allocation5], 128, 128, 8
    $region37: #{tpu_custom_call.1} parent=1 // pred_fallthru
      _
    // Predicated region
    $region38: #{tpu_custom_call.1} parent=1 // pred_check
      _
    $region39: #{tpu_custom_call.1} parent=1 // pred_check_branch
      %2422 = sbr.rel (0) target = $region41
    $region40: #{tpu_custom_call.1} parent=1 // pred_region
      %2423 = dma.done [#allocation5], 1024
    $region41: #{tpu_custom_call.1} parent=1 // pred_fallthru
      _
    %2424 = vsyncpa [#allocation4], 1
    %2425 = vsyncpa [#allocation7], 1
    %2426 = vsyncpa [#allocation5], 1

</llo_original>
